<compile_context>
chip_gen: v7x
topology: tpu7x:2x2x1
jax: 0.10.0
libtpu: 0.0.40
codegen_flags: <defaults>
</compile_context>

<pallas_src>
import functools

import jax
import jax.numpy as jnp
from jax.experimental import pallas as pl
from jax.experimental.pallas import tpu as pltpu

MAX_CHANNELS = 100
DROPOUT_P = 0.1


def _round_up(x, m):
    return (x + m - 1) // m * m


def _vmem_limit_bytes():
    cap = 64 * 1024 * 1024
    try:
        cap = pltpu.get_tpu_info().vmem_capacity_bytes
    except Exception:
        pass
    return int(max(32 * 1024 * 1024, min(cap * 3 // 4, 100 * 1024 * 1024)))


# ---------------------------------------------------------------------------
# Kernels
# ---------------------------------------------------------------------------
def _gcn_layer1_kernel(seed_ref, adj_ref, x_ref, w1_ref, b1_ref, w2_ref,
                       z_ref, acc_ref, *, tile_m, tile_k, hidden_pad,
                       training, keep_threshold, use_hw_prng):
    """z[i] = dropout(relu((A_hat @ X)[i] @ W1 + b1)) @ W2_scaled."""
    # All program_id / num_programs hoisted to top level (interpret-safe).
    i = pl.program_id(0)
    k = pl.program_id(1)
    nk = pl.num_programs(1)

    @pl.when(k == 0)
    def _():
        acc_ref[...] = jnp.zeros_like(acc_ref)

    # X is fully VMEM-resident; slice the current reduction block in-kernel.
    x_blk = x_ref[pl.ds(k * tile_k, tile_k), :]
    acc_ref[...] += jnp.dot(adj_ref[...], x_blk,
                            preferred_element_type=jnp.float32)

    @pl.when(k == nk - 1)
    def _():
        agg = acc_ref[...].astype(jnp.bfloat16)            # [tm, C_in_pad]
        h = jnp.dot(agg, w1_ref[...],
                    preferred_element_type=jnp.float32) + b1_ref[...]
        h = jnp.maximum(h, 0.0)                            # ReLU, f32

        if training:
            if use_hw_prng:
                # Hardware PRNG: ~1 op per vreg (vs ~12 VALU ops for the hash).
                pltpu.prng_seed(seed_ref[0], i)
                bits = pltpu.prng_random_bits(h.shape)
                if bits.dtype != jnp.uint32:
                    bits = pltpu.bitcast(bits, jnp.uint32)
            else:
                # Portable counter-based hash PRNG (interpret-mode fallback).
                rows = jax.lax.broadcasted_iota(jnp.int32, h.shape, 0)
                cols = jax.lax.broadcasted_iota(jnp.int32, h.shape, 1)
                rows = rows.astype(jnp.uint32) + (i * tile_m).astype(jnp.uint32)
                cols = cols.astype(jnp.uint32)
                key = rows * jnp.uint32(hidden_pad) + cols
                key = key ^ (seed_ref[0].astype(jnp.uint32)
                             * jnp.uint32(0x9E3779B9))
                key = key ^ (key >> jnp.uint32(16))
                key = key * jnp.uint32(0x85EBCA6B)
                key = key ^ (key >> jnp.uint32(13))
                key = key * jnp.uint32(0xC2B2AE35)
                key = key ^ (key >> jnp.uint32(16))
                bits = key
            keep = bits < jnp.uint32(keep_threshold)
            h = jnp.where(keep, h, 0.0)
            # NOTE: the inverted-dropout 1/keep_p rescale is folded into W2.

        z_ref[...] = jnp.dot(h.astype(jnp.bfloat16), w2_ref[...],
                             preferred_element_type=jnp.float32
                             ).astype(z_ref.dtype)


def _gcn_layer2_kernel(adj_ref, z_ref, b2_ref, o_ref, acc_ref, *, tile_k):
    """out[i] = relu((A_hat @ z)[i] + b2)."""
    k = pl.program_id(1)
    nk = pl.num_programs(1)

    @pl.when(k == 0)
    def _():
        acc_ref[...] = jnp.zeros_like(acc_ref)

    z_blk = z_ref[pl.ds(k * tile_k, tile_k), :]
    acc_ref[...] += jnp.dot(adj_ref[...], z_blk,
                            preferred_element_type=jnp.float32)

    @pl.when(k == nk - 1)
    def _():
        o_ref[...] = jnp.maximum(acc_ref[...] + b2_ref[...],
                                 0.0).astype(o_ref.dtype)


# ---------------------------------------------------------------------------
# Plain-JAX preprocessing: padded dense normalized adjacency (PyG gcn_norm)
# ---------------------------------------------------------------------------
def gcn_norm_dense_adj_padded(edge_index, num_nodes, n_pad,
                              dtype=jnp.bfloat16):
    src = edge_index[0]
    dst = edge_index[1]
    adj = jnp.zeros((n_pad, n_pad), jnp.float32).at[dst, src].add(1.0)
    # add_remaining_self_loops with unit weights: diagonal entries end up
    # exactly 1 for every real node (existing loops are deduplicated to 1).
    idx = jnp.arange(num_nodes)
    adj = adj.at[idx, idx].set(1.0)
    deg = adj.sum(axis=1)                     # padded rows/cols stay 0
    dinv = jnp.where(deg > 0, jax.lax.rsqrt(deg), 0.0)
    return (adj * dinv[:, None] * dinv[None, :]).astype(dtype)


# ---------------------------------------------------------------------------
# Forward wrapper
# ---------------------------------------------------------------------------
def l2gcn_forward(x, edge_index, w1, b1, w2, b2, *, dropout_seed=0,
                  training=True, p=DROPOUT_P, use_hw_prng=None):
    n, in_ch = x.shape
    hidden = w1.shape[1]
    out_ch = w2.shape[1]
    keep_p = 1.0 - p

    if use_hw_prng is None:
        use_hw_prng = (jax.default_backend() == "tpu")

    # ---- padded, lane-dense layout ----------------------------------------
    lane = 128
    cin_pad = _round_up(in_ch, lane)
    cout_pad = _round_up(out_ch, lane)
    hid_pad = _round_up(hidden, lane)              # 400 -> 512

    # Row tile (output / accumulator rows): <= 512, and prefer >= 2 row tiles
    # so the "parallel" axis can span both v7x TensorCores.
    tile_m = min(512, _round_up(n, lane))
    if _round_up(n, tile_m) // tile_m < 2 and tile_m > lane:
        tile_m = max(lane, (_round_up(n, lane) // 2) // lane * lane)
    n_pad = _round_up(n, tile_m)
    num_i = n_pad // tile_m

    # Reduction tile (adjacency columns): largest multiple of tile_m that
    # divides n_pad, capped at 2048 (bigger contiguous DMAs, fewer grid steps).
    tile_k = tile_m
    mult = 2
    while tile_m * mult <= min(2048, n_pad):
        if n_pad % (tile_m * mult) == 0:
            tile_k = tile_m * mult
        mult += 1
    num_k = n_pad // tile_k

    # ---- operands -----------------------------------------------------------
    adj_p = gcn_norm_dense_adj_padded(edge_index, n, n_pad, jnp.bfloat16)
    x_p = jnp.zeros((n_pad, cin_pad), jnp.bfloat16).at[:n, :in_ch].set(
        x.astype(jnp.bfloat16))
    # bf16 weights for the (un-hidden) epilogue matmuls; f32 biases.
    w1_p = jnp.zeros((cin_pad, hid_pad), jnp.bfloat16).at[:in_ch, :hidden].set(
        w1.astype(jnp.bfloat16))
    b1_p = jnp.zeros((1, hid_pad), jnp.float32).at[:, :hidden].set(
        b1.reshape(1, -1))
    # Fold the inverted-dropout 1/keep_p rescale into W2 (one-time, host side).
    w2_eff = (w2 / keep_p) if training else w2
    w2_p = jnp.zeros((hid_pad, cout_pad), jnp.bfloat16).at[:hidden, :out_ch].set(
        w2_eff.astype(jnp.bfloat16))
    b2_p = jnp.zeros((1, cout_pad), jnp.float32).at[:, :out_ch].set(
        b2.reshape(1, -1))

    seed_arr = jnp.asarray([dropout_seed], dtype=jnp.int32)

    compiler_params = pltpu.CompilerParams(
        dimension_semantics=("parallel", "arbitrary"),
        vmem_limit_bytes=_vmem_limit_bytes())

    # ---- layer 1 (agg + W1 + bias + ReLU + dropout + W2 projection) ---------
    kernel1 = functools.partial(
        _gcn_layer1_kernel, tile_m=tile_m, tile_k=tile_k, hidden_pad=hid_pad,
        training=training, use_hw_prng=use_hw_prng,
        keep_threshold=min(int(keep_p * (1 << 32)), (1 << 32) - 1))
    z = pl.pallas_call(
        kernel1,
        out_shape=jax.ShapeDtypeStruct((n_pad, cout_pad), jnp.bfloat16),
        grid=(num_i, num_k),
        in_specs=[
            pl.BlockSpec(memory_space=pltpu.MemorySpace.SMEM),        # seed
            pl.BlockSpec((tile_m, tile_k), lambda i, k: (i, k)),      # A_hat
            pl.BlockSpec((n_pad, cin_pad), lambda i, k: (0, 0)),      # X (resident)
            pl.BlockSpec((cin_pad, hid_pad), lambda i, k: (0, 0)),    # W1
            pl.BlockSpec((1, hid_pad), lambda i, k: (0, 0)),          # b1
            pl.BlockSpec((hid_pad, cout_pad), lambda i, k: (0, 0)),   # W2
        ],
        out_specs=pl.BlockSpec((tile_m, cout_pad), lambda i, k: (i, 0)),
        scratch_shapes=[pltpu.VMEM((tile_m, cin_pad), jnp.float32)],
        compiler_params=compiler_params,
    )(seed_arr, adj_p, x_p, w1_p, b1_p, w2_p)

    # ---- layer 2 aggregation (+ bias + ReLU) --------------------------------
    kernel2 = functools.partial(_gcn_layer2_kernel, tile_k=tile_k)
    out_p = pl.pallas_call(
        kernel2,
        out_shape=jax.ShapeDtypeStruct((n_pad, cout_pad), jnp.float32),
        grid=(num_i, num_k),
        in_specs=[
            pl.BlockSpec((tile_m, tile_k), lambda i, k: (i, k)),      # A_hat
            pl.BlockSpec((n_pad, cout_pad), lambda i, k: (0, 0)),     # z (resident)
            pl.BlockSpec((1, cout_pad), lambda i, k: (0, 0)),         # b2
        ],
        out_specs=pl.BlockSpec((tile_m, cout_pad), lambda i, k: (i, 0)),
        scratch_shapes=[pltpu.VMEM((tile_m, cout_pad), jnp.float32)],
        compiler_params=compiler_params,
    )(adj_p, z, b2_p)

    return out_p[:n, :out_ch]


# ---------------------------------------------------------------------------
# Deterministic parameter init (Glorot uniform weights, zero bias — PyG default)
# ---------------------------------------------------------------------------
def glorot(key, fan_in, fan_out):
    limit = (6.0 / (fan_in + fan_out)) ** 0.5
    return jax.random.uniform(key, (fan_in, fan_out), jnp.float32, -limit, limit)


if __name__ == "__main__":
    key = jax.random.PRNGKey(0)
    N, in_ch, out_ch = 16, 4, 4
    hidden = MAX_CHANNELS * out_ch  # 400

    kx, ks, kd, kw = jax.random.split(key, 4)
    x = jax.random.normal(kx, (N, in_ch), jnp.float32)
    num_edges = 32
    src = jax.random.randint(ks, (num_edges,), 0, N, dtype=jnp.int32)
    dst = jax.random.randint(kd, (num_edges,), 0, N, dtype=jnp.int32)
    edge_index = jnp.stack([src, dst])  # [2, E]

    kw1, kw2 = jax.random.split(kw)
    w1 = glorot(kw1, in_ch, hidden)
    b1 = jnp.zeros((hidden,), jnp.float32)
    w2 = glorot(kw2, hidden, out_ch)
    b2 = jnp.zeros((out_ch,), jnp.float32)

    out = l2gcn_forward(x, edge_index, w1, b1, w2, b2,
                        dropout_seed=0, training=True)
    jax.block_until_ready(out)
    assert out.shape == (N, out_ch) and out.dtype == jnp.float32
    assert bool(jnp.all(jnp.isfinite(out)))
    print("KERNEL_OK")
</pallas_src>

<mosaic_0001>
module attributes {stable_mosaic.version = 11 : i64} {
  func.func @_gcn_layer1_kernel(%arg0: i32, %arg1: i32, %arg2: memref<1xi32, #tpu.memory_space<smem>>, %arg3: memref<128x128xbf16, #tpu.memory_space<vmem>>, %arg4: memref<128x128xbf16, #tpu.memory_space<vmem>>, %arg5: memref<128x512xbf16, #tpu.memory_space<vmem>>, %arg6: memref<1x512xf32, #tpu.memory_space<vmem>>, %arg7: memref<512x128xbf16, #tpu.memory_space<vmem>>, %arg8: memref<128x128xbf16, #tpu.memory_space<vmem>>, %arg9: memref<128x128xf32, #tpu.memory_space<vmem>>) attributes {dimension_semantics = [#tpu.dimension_semantics<parallel>, #tpu.dimension_semantics<arbitrary>], iteration_bounds = array<i64: 1, 1>, scalar_prefetch = 0 : i64, scratch_operands = 1 : i64, tpu.core_type = #tpu.core_type<tc>, window_params = [{transform_indices = @transform_0, window_bounds = array<i64: 1>}, {transform_indices = @transform_1, window_bounds = array<i64: 128, 128>}, {pipeline_mode = #tpu.pipeline_mode<synchronous>, transform_indices = @transform_2, window_bounds = array<i64: 128, 128>}, {pipeline_mode = #tpu.pipeline_mode<synchronous>, transform_indices = @transform_3, window_bounds = array<i64: 128, 512>}, {pipeline_mode = #tpu.pipeline_mode<synchronous>, transform_indices = @transform_4, window_bounds = array<i64: 1, 512>}, {pipeline_mode = #tpu.pipeline_mode<synchronous>, transform_indices = @transform_5, window_bounds = array<i64: 512, 128>}, {transform_indices = @transform_6, window_bounds = array<i64: 128, 128>}]} {
    %c0_i32 = arith.constant 0 : i32
    %0 = arith.cmpi eq, %arg1, %c0_i32 : i32
    %1 = arith.extui %0 : i1 to i32
    %c0_i32_0 = arith.constant 0 : i32
    %2 = arith.cmpi ne, %1, %c0_i32_0 : i32
    scf.if %2 {
      %cst_9 = arith.constant 0.000000e+00 : f32
      %14 = vector.broadcast %cst_9 : f32 to vector<128x128xf32>
      %c0_10 = arith.constant 0 : index
      %c0_11 = arith.constant 0 : index
      %15 = vector.load %arg9[%c0_10, %c0_11] : memref<128x128xf32, #tpu.memory_space<vmem>>, vector<128x128xf32>
      tpu.vector_store %arg9[%c0_10, %c0_11], %14 {strides = array<i32>} : memref<128x128xf32, #tpu.memory_space<vmem>>, vector<128x128xf32>,
    } else {
    }
    %c128_i32 = arith.constant 128 : i32
    %3 = arith.muli %arg1, %c128_i32 : i32
    %4 = arith.index_cast %3 : i32 to index
    %c0 = arith.constant 0 : index
    %5 = vector.load %arg4[%4, %c0] : memref<128x128xbf16, #tpu.memory_space<vmem>>, vector<128x128xbf16>
    %c0_1 = arith.constant 0 : index
    %c0_2 = arith.constant 0 : index
    %6 = vector.load %arg9[%c0_1, %c0_2] : memref<128x128xf32, #tpu.memory_space<vmem>>, vector<128x128xf32>
    %c0_3 = arith.constant 0 : index
    %c0_4 = arith.constant 0 : index
    %7 = vector.load %arg3[%c0_3, %c0_4] : memref<128x128xbf16, #tpu.memory_space<vmem>>, vector<128x128xbf16>
    %cst = arith.constant dense<0.000000e+00> : vector<128x128xf32>
    %8 = tpu.matmul %7, %5, %cst {dimension_numbers = #tpu.dot_dimension_numbers<[1], [0], [0], [1], [0, 0, 1, 1], [], []>} : vector<128x128xbf16>, vector<128x128xbf16>, vector<128x128xf32> -> vector<128x128xf32>
    %9 = arith.addf %6, %8 : vector<128x128xf32>
    %c0_5 = arith.constant 0 : index
    %c0_6 = arith.constant 0 : index
    %10 = vector.load %arg9[%c0_5, %c0_6] : memref<128x128xf32, #tpu.memory_space<vmem>>, vector<128x128xf32>
    tpu.vector_store %arg9[%c0_5, %c0_6], %9 {strides = array<i32>} : memref<128x128xf32, #tpu.memory_space<vmem>>, vector<128x128xf32>,
    %c0_i32_7 = arith.constant 0 : i32
    %11 = arith.cmpi eq, %arg1, %c0_i32_7 : i32
    %12 = arith.extui %11 : i1 to i32
    %c0_i32_8 = arith.constant 0 : i32
    %13 = arith.cmpi ne, %12, %c0_i32_8 : i32
    scf.if %13 {
      %c0_9 = arith.constant 0 : index
      %c0_10 = arith.constant 0 : index
      %14 = vector.load %arg9[%c0_9, %c0_10] : memref<128x128xf32, #tpu.memory_space<vmem>>, vector<128x128xf32>
      %15 = arith.truncf %14 : vector<128x128xf32> to vector<128x128xbf16>
      %c0_11 = arith.constant 0 : index
      %c0_12 = arith.constant 0 : index
      %16 = vector.load %arg5[%c0_11, %c0_12] : memref<128x512xbf16, #tpu.memory_space<vmem>>, vector<128x512xbf16>
      %cst_13 = arith.constant dense<0.000000e+00> : vector<128x512xf32>
      %17 = tpu.matmul %15, %16, %cst_13 {dimension_numbers = #tpu.dot_dimension_numbers<[1], [0], [0], [1], [0, 0, 1, 1], [], []>} : vector<128x128xbf16>, vector<128x512xbf16>, vector<128x512xf32> -> vector<128x512xf32>
      %c0_14 = arith.constant 0 : index
      %c0_15 = arith.constant 0 : index
      %18 = vector.load %arg6[%c0_14, %c0_15] : memref<1x512xf32, #tpu.memory_space<vmem>>, vector<1x512xf32>
      %19 = vector.broadcast %18 : vector<1x512xf32> to vector<128x512xf32>
      %20 = arith.addf %17, %19 : vector<128x512xf32>
      %cst_16 = arith.constant 0.000000e+00 : f32
      %21 = vector.broadcast %cst_16 : f32 to vector<128x512xf32>
      %22 = arith.maximumf %20, %21 : vector<128x512xf32>
      %23 = tpu.iota {dimensions = array<i32: 0>} : vector<128x512xi32>
      %24 = tpu.iota {dimensions = array<i32: 1>} : vector<128x512xi32>
      %c128_i32_17 = arith.constant 128 : i32
      %25 = arith.muli %arg0, %c128_i32_17 : i32
      %26 = vector.broadcast %25 : i32 to vector<128x512xi32>
      %27 = arith.addi %23, %26 : vector<128x512xi32>
      %c512_i32 = arith.constant 512 : i32
      %28 = vector.broadcast %c512_i32 : i32 to vector<128x512xi32>
      %29 = arith.muli %27, %28 : vector<128x512xi32>
      %30 = arith.addi %29, %24 : vector<128x512xi32>
      %c0_18 = arith.constant 0 : index
      %31 = memref.load %arg2[%c0_18] : memref<1xi32, #tpu.memory_space<smem>>
      %c-1640531527_i32 = arith.constant -1640531527 : i32
      %32 = arith.muli %31, %c-1640531527_i32 : i32
      %33 = vector.broadcast %32 : i32 to vector<128x512xi32>
      %34 = arith.xori %30, %33 : vector<128x512xi32>
      %c16_i32 = arith.constant 16 : i32
      %35 = vector.broadcast %c16_i32 : i32 to vector<128x512xi32>
      %36 = arith.shrui %34, %35 : vector<128x512xi32>
      %37 = arith.xori %34, %36 : vector<128x512xi32>
      %c-2048144789_i32 = arith.constant -2048144789 : i32
      %38 = vector.broadcast %c-2048144789_i32 : i32 to vector<128x512xi32>
      %39 = arith.muli %37, %38 : vector<128x512xi32>
      %c13_i32 = arith.constant 13 : i32
      %40 = vector.broadcast %c13_i32 : i32 to vector<128x512xi32>
      %41 = arith.shrui %39, %40 : vector<128x512xi32>
      %42 = arith.xori %39, %41 : vector<128x512xi32>
      %c-1028477387_i32 = arith.constant -1028477387 : i32
      %43 = vector.broadcast %c-1028477387_i32 : i32 to vector<128x512xi32>
      %44 = arith.muli %42, %43 : vector<128x512xi32>
      %c16_i32_19 = arith.constant 16 : i32
      %45 = vector.broadcast %c16_i32_19 : i32 to vector<128x512xi32>
      %46 = arith.shrui %44, %45 : vector<128x512xi32>
      %47 = arith.xori %44, %46 : vector<128x512xi32>
      %c-429496730_i32 = arith.constant -429496730 : i32
      %48 = vector.broadcast %c-429496730_i32 : i32 to vector<128x512xi32>
      %49 = arith.cmpi ult, %47, %48 : vector<128x512xi32>
      %cst_20 = arith.constant 0.000000e+00 : f32
      %50 = vector.broadcast %cst_20 : f32 to vector<128x512xf32>
      %51 = arith.select %49, %22, %50 : vector<128x512xi1>, vector<128x512xf32>
      %52 = arith.truncf %51 : vector<128x512xf32> to vector<128x512xbf16>
      %c0_21 = arith.constant 0 : index
      %c0_22 = arith.constant 0 : index
      %53 = vector.load %arg7[%c0_21, %c0_22] : memref<512x128xbf16, #tpu.memory_space<vmem>>, vector<512x128xbf16>
      %cst_23 = arith.constant dense<0.000000e+00> : vector<128x128xf32>
      %54 = tpu.matmul %52, %53, %cst_23 {dimension_numbers = #tpu.dot_dimension_numbers<[1], [0], [0], [1], [0, 0, 1, 1], [], []>} : vector<128x512xbf16>, vector<512x128xbf16>, vector<128x128xf32> -> vector<128x128xf32>
      %55 = arith.truncf %54 : vector<128x128xf32> to vector<128x128xbf16>
      %c0_24 = arith.constant 0 : index
      %c0_25 = arith.constant 0 : index
      %56 = vector.load %arg8[%c0_24, %c0_25] : memref<128x128xbf16, #tpu.memory_space<vmem>>, vector<128x128xbf16>
      tpu.vector_store %arg8[%c0_24, %c0_25], %55 {strides = array<i32>} : memref<128x128xbf16, #tpu.memory_space<vmem>>, vector<128x128xbf16>,
    } else {
    }
    return
  }
  func.func @transform_0(%arg0: i32, %arg1: i32) -> i32 {
    %c0_i32 = arith.constant 0 : i32
    %c0_i32_0 = arith.constant 0 : i32
    return %c0_i32 : i32
  }
  func.func @transform_1(%arg0: i32, %arg1: i32) -> (i32, i32) {
    %c0_i32 = arith.constant 0 : i32
    return %arg0, %arg1 : i32, i32
  }
  func.func @transform_2(%arg0: i32, %arg1: i32) -> (i32, i32) {
    %c0_i32 = arith.constant 0 : i32
    %c0_i32_0 = arith.constant 0 : i32
    %c0_i32_1 = arith.constant 0 : i32
    return %c0_i32, %c0_i32_0 : i32, i32
  }
  func.func @transform_3(%arg0: i32, %arg1: i32) -> (i32, i32) {
    %c0_i32 = arith.constant 0 : i32
    %c0_i32_0 = arith.constant 0 : i32
    %c0_i32_1 = arith.constant 0 : i32
    return %c0_i32, %c0_i32_0 : i32, i32
  }
  func.func @transform_4(%arg0: i32, %arg1: i32) -> (i32, i32) {
    %c0_i32 = arith.constant 0 : i32
    %c0_i32_0 = arith.constant 0 : i32
    %c0_i32_1 = arith.constant 0 : i32
    return %c0_i32, %c0_i32_0 : i32, i32
  }
  func.func @transform_5(%arg0: i32, %arg1: i32) -> (i32, i32) {
    %c0_i32 = arith.constant 0 : i32
    %c0_i32_0 = arith.constant 0 : i32
    %c0_i32_1 = arith.constant 0 : i32
    return %c0_i32, %c0_i32_0 : i32, i32
  }
  func.func @transform_6(%arg0: i32, %arg1: i32) -> (i32, i32) {
    %c0_i32 = arith.constant 0 : i32
    %c0_i32_0 = arith.constant 0 : i32
    return %arg0, %c0_i32 : i32, i32
  }
}

</mosaic_0001>

<llo_original>
// kernel: tpu_custom_call.1
$region0: #{tpu_custom_call.1}
  #allocation0 [shape = 'u32[]', space=smem, size = 0x4, offset = 0x4, fixed_abs, tag = 'smem constant byte address 0x4 - core index']
  #allocation1 [shape = 'u32[144,128]{1,0:T(1,128)}', space=vmem, size = 0x12000, scoped, tag = 'internal scratch']
  #allocation2 [shape = 'f32[128,128]{1,0:T(8,128)}', space=vmem, size = 0x10000, scoped, tag = 'scratch operand']
  #allocation3 [shape = 's32[1]{0:T(128)S(6)}', space=smem, size = 0x200, scoped, tag = 'scoped memory for tpu_custom_call.1']
  %s0 = inlined_call_operand.<no memory space> [shape: s32[1], index: 0, kind: input, shape index: {}]
  %s1 = inlined_call_operand.hbm [shape: bf16[128,128], index: 1, kind: input, shape index: {}]
  %s2 = inlined_call_operand.hbm [shape: bf16[128,128], index: 2, kind: input, shape index: {}]
  %s3 = inlined_call_operand.hbm [shape: bf16[128,512], index: 3, kind: input, shape index: {}]
  %s4 = inlined_call_operand.vmem [shape: f32[1,512], index: 4, kind: input, shape index: {}]
  %s5 = inlined_call_operand.hbm [shape: bf16[512,128], index: 5, kind: input, shape index: {}]
  %s6 = inlined_call_operand.hbm [shape: bf16[128,128], index: 6, kind: output, shape index: {}]
  %s7 = sld [smem:[#allocation0]]
  $region58: #{tpu_custom_call.1} parent=0
    _
  %s9 = ssub.s32 1, %s7
  %s10 = scalar_select 0, %s9, %s7
  %11 = sst [smem:[#allocation3]] %s0
  $region1: #{tpu_custom_call.1} parent=0
    #allocation4 [shape = 'u8[32768]{0}', space=vmem, size = 0x8000, scoped, tag = 'input window, operand 1, single buffered']
    #allocation5 [shape = 's32[1]{0}', space=sflag, size = 0x4, scoped, tag = 'scoped memory for tpu_custom_call.1']
    #allocation6 [shape = 's32[1]{0}', space=sflag, size = 0x4, scoped, tag = 'scoped memory for tpu_custom_call.1']
    #allocation7 [shape = 'u8[32768]{0}', space=vmem, size = 0x8000, scoped, tag = 'input window, operand 2, single buffered']
    #allocation8 [shape = 's32[1]{0}', space=sflag, size = 0x4, scoped, tag = 'scoped memory for tpu_custom_call.1']
    #allocation9 [shape = 'u8[131072]{0}', space=vmem, size = 0x20000, scoped, tag = 'input window, operand 3, single buffered']
    #allocation10 [shape = 'u8[131072]{0}', space=vmem, size = 0x20000, scoped, tag = 'input window, operand 5, single buffered']
    #allocation11 [shape = 's32[1]{0}', space=sflag, size = 0x4, scoped, tag = 'scoped memory for tpu_custom_call.1']
    #allocation12 [shape = 'u8[32768]{0}', space=vmem, size = 0x8000, scoped, tag = 'output window, operand 0, single buffered']
    %12 = vsyncpa [#allocation5], 0
    %13 = vsyncpa [#allocation8], 0
    %14 = vsyncpa [#allocation11], 0
    %15 = vsyncpa [#allocation6], 0
    // Predicated region
    $region2: #{tpu_custom_call.1} parent=1 // pred_check
      _
    $region3: #{tpu_custom_call.1} parent=1 // pred_check_branch
      %17 = sbr.rel (0) target = $region5
    $region4: #{tpu_custom_call.1} parent=1 // pred_region
      _
    $region5: #{tpu_custom_call.1} parent=1 // pred_fallthru
      _
    // Predicated region
    $region6: #{tpu_custom_call.1} parent=1 // pred_check
      _
    $region7: #{tpu_custom_call.1} parent=1 // pred_check_branch
      %19 = sbr.rel (0) target = $region9
    $region8: #{tpu_custom_call.1} parent=1 // pred_region
      %s21 = ssub.s32 1024, 1024
      %22 = vsyncadd [#allocation5], %s21
      %s23 = sshll.u32 [#allocation4], 4
      %s24 = int_to_ptr.vmem [resolvable:$true] %s23
      %29 = dma.hbm_to_vmem [thread:$0]  %s1, 1024, %s24, [#allocation5], 64, 64, 4
    $region9: #{tpu_custom_call.1} parent=1 // pred_fallthru
      _
    // Predicated region
    $region10: #{tpu_custom_call.1} parent=1 // pred_check
      _
    $region11: #{tpu_custom_call.1} parent=1 // pred_check_branch
      %31 = sbr.rel (0) target = $region13
    $region12: #{tpu_custom_call.1} parent=1 // pred_region
      %s33 = ssub.s32 1024, 1024
      %34 = vsyncadd [#allocation8], %s33
      %s35 = sshll.u32 [#allocation7], 4
      %s36 = int_to_ptr.vmem [resolvable:$true] %s35
      %41 = dma.hbm_to_vmem [thread:$0]  %s2, 1024, %s36, [#allocation8], 64, 64, 4
    $region13: #{tpu_custom_call.1} parent=1 // pred_fallthru
      _
    // Predicated region
    $region14: #{tpu_custom_call.1} parent=1 // pred_check
      _
    $region15: #{tpu_custom_call.1} parent=1 // pred_check_branch
      %43 = sbr.rel (0) target = $region17
    $region16: #{tpu_custom_call.1} parent=1 // pred_region
      %s45 = ssub.s32 4096, 4096
      %46 = vsyncadd [#allocation8], %s45
      %s47 = sshll.u32 [#allocation9], 4
      %s48 = int_to_ptr.vmem [resolvable:$true] %s47
      %53 = dma.hbm_to_vmem [thread:$0]  %s3, 4096, %s48, [#allocation8], 256, 256, 16
    $region17: #{tpu_custom_call.1} parent=1 // pred_fallthru
      _
    // Predicated region
    $region18: #{tpu_custom_call.1} parent=1 // pred_check
      _
    $region19: #{tpu_custom_call.1} parent=1 // pred_check_branch
      %55 = sbr.rel (0) target = $region21
    $region20: #{tpu_custom_call.1} parent=1 // pred_region
      _
    $region21: #{tpu_custom_call.1} parent=1 // pred_fallthru
      _
    // Predicated region
    $region22: #{tpu_custom_call.1} parent=1 // pred_check
      _
    $region23: #{tpu_custom_call.1} parent=1 // pred_check_branch
      %57 = sbr.rel (0) target = $region25
    $region24: #{tpu_custom_call.1} parent=1 // pred_region
      %s59 = ssub.s32 4096, 4096
      %60 = vsyncadd [#allocation11], %s59
      %s61 = sshll.u32 [#allocation10], 4
      %s62 = int_to_ptr.vmem [resolvable:$true] %s61
      %67 = dma.hbm_to_vmem [thread:$0]  %s5, 4096, %s62, [#allocation11], 64, 64, 4
    $region25: #{tpu_custom_call.1} parent=1 // pred_fallthru
      _
    // Predicated region
    $region26: #{tpu_custom_call.1} parent=1 // pred_check
      _
    $region27: #{tpu_custom_call.1} parent=1 // pred_check_branch
      %69 = sbr.rel (0) target = $region29
    $region28: #{tpu_custom_call.1} parent=1 // pred_region
      %70 = dma.done [#allocation5], 1024
    $region29: #{tpu_custom_call.1} parent=1 // pred_fallthru
      _
    // Predicated region
    $region30: #{tpu_custom_call.1} parent=1 // pred_check
      _
    $region31: #{tpu_custom_call.1} parent=1 // pred_check_branch
      %72 = sbr.rel (0) target = $region33
    $region32: #{tpu_custom_call.1} parent=1 // pred_region
      %73 = dma.done [#allocation8], 1024
    $region33: #{tpu_custom_call.1} parent=1 // pred_fallthru
      _
    // Predicated region
    $region34: #{tpu_custom_call.1} parent=1 // pred_check
      _
    $region35: #{tpu_custom_call.1} parent=1 // pred_check_branch
      %75 = sbr.rel (0) target = $region37
    $region36: #{tpu_custom_call.1} parent=1 // pred_region
      %76 = dma.done [#allocation8], 4096
    $region37: #{tpu_custom_call.1} parent=1 // pred_fallthru
      _
    // Predicated region
    $region38: #{tpu_custom_call.1} parent=1 // pred_check
      _
    $region39: #{tpu_custom_call.1} parent=1 // pred_check_branch
      %78 = sbr.rel (0) target = $region41
    $region40: #{tpu_custom_call.1} parent=1 // pred_region
      %79 = dma.done [#allocation11], 4096
    $region41: #{tpu_custom_call.1} parent=1 // pred_fallthru
      _
    %p81 = scmp.eq.s32.totalorder 0, 0
    // Predicated region
    $region42: #{tpu_custom_call.1} parent=1 // pred_check
      %p82 = pneg %p81
    $region43: #{tpu_custom_call.1} parent=1 // pred_check_branch
      %84 = sbr.rel (%p82) target = $region45
    $region44: #{tpu_custom_call.1} parent=1 // pred_region
      %85 = vst [vmem:[#allocation2] sm:$0xff] 0.0
      %86 = vst [vmem:[#allocation2 + $0x8] sm:$0xff] 0.0
      %87 = vst [vmem:[#allocation2 + $0x10] sm:$0xff] 0.0
      %88 = vst [vmem:[#allocation2 + $0x18] sm:$0xff] 0.0
      %89 = vst [vmem:[#allocation2 + $0x20] sm:$0xff] 0.0
      %90 = vst [vmem:[#allocation2 + $0x28] sm:$0xff] 0.0
      %91 = vst [vmem:[#allocation2 + $0x30] sm:$0xff] 0.0
      %92 = vst [vmem:[#allocation2 + $0x38] sm:$0xff] 0.0
      %93 = vst [vmem:[#allocation2 + $0x40] sm:$0xff] 0.0
      %94 = vst [vmem:[#allocation2 + $0x48] sm:$0xff] 0.0
      %95 = vst [vmem:[#allocation2 + $0x50] sm:$0xff] 0.0
      %96 = vst [vmem:[#allocation2 + $0x58] sm:$0xff] 0.0
      %97 = vst [vmem:[#allocation2 + $0x60] sm:$0xff] 0.0
      %98 = vst [vmem:[#allocation2 + $0x68] sm:$0xff] 0.0
      %99 = vst [vmem:[#allocation2 + $0x70] sm:$0xff] 0.0
      %100 = vst [vmem:[#allocation2 + $0x78] sm:$0xff] 0.0
    $region45: #{tpu_custom_call.1} parent=1 // pred_fallthru
      _
    %s101 = smul.u32 0, 128
    %s102 = sshra.s32 %s101, 3
    %s103 = sand.u32 %s101, 7
    %s104 = smul.addr %s102, 4
    %s105 = scalar_lea.vmem [#allocation7], %s104
    %v106 = vld [vmem:[%s105] sm:$0xf]
    %v107 = vld [vmem:[%s105 + $0x4] sm:$0xf]
    %v108 = vld [vmem:[%s105 + $0x8] sm:$0xf]
    %v109 = vld [vmem:[%s105 + $0xc] sm:$0xf]
    %v110 = vld [vmem:[%s105 + $0x10] sm:$0xf]
    %v111 = vld [vmem:[%s105 + $0x14] sm:$0xf]
    %v112 = vld [vmem:[%s105 + $0x18] sm:$0xf]
    %v113 = vld [vmem:[%s105 + $0x1c] sm:$0xf]
    %v114 = vld [vmem:[%s105 + $0x20] sm:$0xf]
    %v115 = vld [vmem:[%s105 + $0x24] sm:$0xf]
    %v116 = vld [vmem:[%s105 + $0x28] sm:$0xf]
    %v117 = vld [vmem:[%s105 + $0x2c] sm:$0xf]
    %v118 = vld [vmem:[%s105 + $0x30] sm:$0xf]
    %v119 = vld [vmem:[%s105 + $0x34] sm:$0xf]
    %v120 = vld [vmem:[%s105 + $0x38] sm:$0xf]
    %v121 = vld [vmem:[%s105 + $0x3c] sm:$0xf]
    %v122 = vld [vmem:[#allocation2] sm:$0xff]
    %v123 = vld [vmem:[#allocation2 + $0x8] sm:$0xff]
    %v124 = vld [vmem:[#allocation2 + $0x10] sm:$0xff]
    %v125 = vld [vmem:[#allocation2 + $0x18] sm:$0xff]
    %v126 = vld [vmem:[#allocation2 + $0x20] sm:$0xff]
    %v127 = vld [vmem:[#allocation2 + $0x28] sm:$0xff]
    %v128 = vld [vmem:[#allocation2 + $0x30] sm:$0xff]
    %v129 = vld [vmem:[#allocation2 + $0x38] sm:$0xff]
    %v130 = vld [vmem:[#allocation2 + $0x40] sm:$0xff]
    %v131 = vld [vmem:[#allocation2 + $0x48] sm:$0xff]
    %v132 = vld [vmem:[#allocation2 + $0x50] sm:$0xff]
    %v133 = vld [vmem:[#allocation2 + $0x58] sm:$0xff]
    %v134 = vld [vmem:[#allocation2 + $0x60] sm:$0xff]
    %v135 = vld [vmem:[#allocation2 + $0x68] sm:$0xff]
    %v136 = vld [vmem:[#allocation2 + $0x70] sm:$0xff]
    %v137 = vld [vmem:[#allocation2 + $0x78] sm:$0xff]
    %v138 = vld [vmem:[#allocation4] sm:$0xf]
    %v139 = vld [vmem:[#allocation4 + $0x4] sm:$0xf]
    %v140 = vld [vmem:[#allocation4 + $0x8] sm:$0xf]
    %v141 = vld [vmem:[#allocation4 + $0xc] sm:$0xf]
    %v142 = vld [vmem:[#allocation4 + $0x10] sm:$0xf]
    %v143 = vld [vmem:[#allocation4 + $0x14] sm:$0xf]
    %v144 = vld [vmem:[#allocation4 + $0x18] sm:$0xf]
    %v145 = vld [vmem:[#allocation4 + $0x1c] sm:$0xf]
    %v146 = vld [vmem:[#allocation4 + $0x20] sm:$0xf]
    %v147 = vld [vmem:[#allocation4 + $0x24] sm:$0xf]
    %v148 = vld [vmem:[#allocation4 + $0x28] sm:$0xf]
    %v149 = vld [vmem:[#allocation4 + $0x2c] sm:$0xf]
    %v150 = vld [vmem:[#allocation4 + $0x30] sm:$0xf]
    %v151 = vld [vmem:[#allocation4 + $0x34] sm:$0xf]
    %v152 = vld [vmem:[#allocation4 + $0x38] sm:$0xf]
    %v153 = vld [vmem:[#allocation4 + $0x3c] sm:$0xf]
    %v170 = vunpack.c.l.b16 %v138
    %v171 = vunpack.c.l.b16 %v139
    %v172 = vunpack.c.l.b16 %v140
    %v173 = vunpack.c.l.b16 %v141
    %v174 = vunpack.c.l.b16 %v142
    %v175 = vunpack.c.l.b16 %v143
    %v176 = vunpack.c.l.b16 %v144
    %v177 = vunpack.c.l.b16 %v145
    %v178 = vunpack.c.l.b16 %v146
    %v179 = vunpack.c.l.b16 %v147
    %v180 = vunpack.c.l.b16 %v148
    %v181 = vunpack.c.l.b16 %v149
    %v182 = vunpack.c.l.b16 %v150
    %v183 = vunpack.c.l.b16 %v151
    %v184 = vunpack.c.l.b16 %v152
    %v185 = vunpack.c.l.b16 %v153
    %v186 = vpack.c.b16 %v171, %v170
    %v187 = vpack.c.b16 %v173, %v172
    %v188 = vpack.c.b16 %v175, %v174
    %v189 = vpack.c.b16 %v177, %v176
    %v190 = vpack.c.b16 %v179, %v178
    %v191 = vpack.c.b16 %v181, %v180
    %v192 = vpack.c.b16 %v183, %v182
    %v193 = vpack.c.b16 %v185, %v184
    %v218 = vunpack.c.l.b16 %v106
    %v219 = vunpack.c.l.b16 %v107
    %v220 = vunpack.c.l.b16 %v108
    %v221 = vunpack.c.l.b16 %v109
    %v222 = vunpack.c.l.b16 %v110
    %v223 = vunpack.c.l.b16 %v111
    %v224 = vunpack.c.l.b16 %v112
    %v225 = vunpack.c.l.b16 %v113
    %v226 = vunpack.c.l.b16 %v114
    %v227 = vunpack.c.l.b16 %v115
    %v228 = vunpack.c.l.b16 %v116
    %v229 = vunpack.c.l.b16 %v117
    %v230 = vunpack.c.l.b16 %v118
    %v231 = vunpack.c.l.b16 %v119
    %v232 = vunpack.c.l.b16 %v120
    %v233 = vunpack.c.l.b16 %v121
    %v234 = vpack.c.b16 %v219, %v218
    %v235 = vpack.c.b16 %v221, %v220
    %v236 = vpack.c.b16 %v223, %v222
    %v237 = vpack.c.b16 %v225, %v224
    %v238 = vpack.c.b16 %v227, %v226
    %v239 = vpack.c.b16 %v229, %v228
    %v240 = vpack.c.b16 %v231, %v230
    %v241 = vpack.c.b16 %v233, %v232
    %250 = vmatprep.subr.bf16.mxu0 0
    %251 = vmatpush1.bf16.msra.mxu0 %v234
    %252 = vmatprep.subr.bf16.mxu0 0
    %253 = vmatpush1.bf16.msra.mxu0 %v235
    %254 = vmatprep.subr.bf16.mxu0 0
    %255 = vmatpush1.bf16.msra.mxu0 %v236
    %256 = vmatprep.subr.bf16.mxu0 0
    %257 = vmatpush1.bf16.msra.mxu0 %v237
    %258 = vmatprep.subr.bf16.mxu0 0
    %259 = vmatpush1.bf16.msra.mxu0 %v238
    %260 = vmatprep.subr.bf16.mxu0 0
    %261 = vmatpush1.bf16.msra.mxu0 %v239
    %262 = vmatprep.subr.bf16.mxu0 0
    %263 = vmatpush1.bf16.msra.mxu0 %v240
    %264 = vmatprep.subr.bf16.mxu0 0
    %265 = vmatpush1.bf16.msra.mxu0 %v241
    %266 = vmatprep.subr.bf16.mxu0 0
    %267 = vmatpush1.bf16.msra.mxu0 0
    %268 = vmatprep.subr.bf16.mxu0 0
    %269 = vmatpush1.bf16.msra.mxu0 0
    %270 = vmatprep.subr.bf16.mxu0 0
    %271 = vmatpush1.bf16.msra.mxu0 0
    %272 = vmatprep.subr.bf16.mxu0 0
    %273 = vmatpush1.bf16.msra.mxu0 0
    %274 = vmatprep.subr.bf16.mxu0 0
    %275 = vmatpush1.bf16.msra.mxu0 0
    %276 = vmatprep.subr.bf16.mxu0 0
    %277 = vmatpush1.bf16.msra.mxu0 0
    %278 = vmatprep.subr.bf16.mxu0 0
    %279 = vmatpush1.bf16.msra.mxu0 0
    %280 = vmatprep.subr.bf16.mxu0 0
    %281 = vmatpush1.bf16.msra.mxu0 0
    %282 = vmatprep.mubr.bf16.mxu0 0
    %283 = vmatmul.mubr.bf16.gmra.mrb[0].mxu0 %v186
    %v284 = vpop.f32.mrb[0].mxu0
    %v285 = vadd.f32 0.0, %v284
    %v286 = vpop.f32.mrb[0].mxu0
    %v287 = vpop.f32.mrb[0].mxu0
    %v288 = vadd.f32 0.0, %v287
    %v289 = vpop.f32.mrb[0].mxu0
    %290 = vmatprep.mubr.bf16.mxu0 0
    %291 = vmatmul.mubr.bf16.gmra.mrb[0].mxu0 %v187
    %v292 = vpop.f32.mrb[0].mxu0
    %v293 = vadd.f32 0.0, %v292
    %v294 = vpop.f32.mrb[0].mxu0
    %v295 = vpop.f32.mrb[0].mxu0
    %v296 = vadd.f32 0.0, %v295
    %v297 = vpop.f32.mrb[0].mxu0
    %298 = vmatprep.mubr.bf16.mxu0 0
    %299 = vmatmul.mubr.bf16.gmra.mrb[0].mxu0 %v188
    %v300 = vpop.f32.mrb[0].mxu0
    %v301 = vadd.f32 0.0, %v300
    %v302 = vpop.f32.mrb[0].mxu0
    %v303 = vpop.f32.mrb[0].mxu0
    %v304 = vadd.f32 0.0, %v303
    %v305 = vpop.f32.mrb[0].mxu0
    %306 = vmatprep.mubr.bf16.mxu0 0
    %307 = vmatmul.mubr.bf16.gmra.mrb[0].mxu0 %v189
    %v308 = vpop.f32.mrb[0].mxu0
    %v309 = vadd.f32 0.0, %v308
    %v310 = vpop.f32.mrb[0].mxu0
    %v311 = vpop.f32.mrb[0].mxu0
    %v312 = vadd.f32 0.0, %v311
    %v313 = vpop.f32.mrb[0].mxu0
    %314 = vmatprep.mubr.bf16.mxu0 0
    %315 = vmatmul.mubr.bf16.gmra.mrb[0].mxu0 %v190
    %v316 = vpop.f32.mrb[0].mxu0
    %v317 = vadd.f32 0.0, %v316
    %v318 = vpop.f32.mrb[0].mxu0
    %v319 = vpop.f32.mrb[0].mxu0
    %v320 = vadd.f32 0.0, %v319
    %v321 = vpop.f32.mrb[0].mxu0
    %322 = vmatprep.mubr.bf16.mxu0 0
    %323 = vmatmul.mubr.bf16.gmra.mrb[0].mxu0 %v191
    %v324 = vpop.f32.mrb[0].mxu0
    %v325 = vadd.f32 0.0, %v324
    %v326 = vpop.f32.mrb[0].mxu0
    %v327 = vpop.f32.mrb[0].mxu0
    %v328 = vadd.f32 0.0, %v327
    %v329 = vpop.f32.mrb[0].mxu0
    %330 = vmatprep.mubr.bf16.mxu0 0
    %331 = vmatmul.mubr.bf16.gmra.mrb[0].mxu0 %v192
    %v332 = vpop.f32.mrb[0].mxu0
    %v333 = vadd.f32 0.0, %v332
    %v334 = vpop.f32.mrb[0].mxu0
    %v335 = vpop.f32.mrb[0].mxu0
    %v336 = vadd.f32 0.0, %v335
    %v337 = vpop.f32.mrb[0].mxu0
    %338 = vmatprep.mubr.bf16.mxu0 0
    %339 = vmatmul.mubr.bf16.gmra.mrb[0].mxu0 %v193
    %v340 = vpop.f32.mrb[0].mxu0
    %v341 = vadd.f32 0.0, %v340
    %v342 = vpop.f32.mrb[0].mxu0
    %v343 = vpop.f32.mrb[0].mxu0
    %v344 = vadd.f32 0.0, %v343
    %v345 = vpop.f32.mrb[0].mxu0
    %346 = vdwg.mxu0
    %v347 = vadd.f32 %v122, %v285
    %v348 = vadd.f32 %v123, %v288
    %v349 = vadd.f32 %v124, %v293
    %v350 = vadd.f32 %v125, %v296
    %v351 = vadd.f32 %v126, %v301
    %v352 = vadd.f32 %v127, %v304
    %v353 = vadd.f32 %v128, %v309
    %v354 = vadd.f32 %v129, %v312
    %v355 = vadd.f32 %v130, %v317
    %v356 = vadd.f32 %v131, %v320
    %v357 = vadd.f32 %v132, %v325
    %v358 = vadd.f32 %v133, %v328
    %v359 = vadd.f32 %v134, %v333
    %v360 = vadd.f32 %v135, %v336
    %v361 = vadd.f32 %v136, %v341
    %v362 = vadd.f32 %v137, %v344
    %363 = vst [vmem:[#allocation2] sm:$0xff] %v347
    %364 = vst [vmem:[#allocation2 + $0x8] sm:$0xff] %v348
    %365 = vst [vmem:[#allocation2 + $0x10] sm:$0xff] %v349
    %366 = vst [vmem:[#allocation2 + $0x18] sm:$0xff] %v350
    %367 = vst [vmem:[#allocation2 + $0x20] sm:$0xff] %v351
    %368 = vst [vmem:[#allocation2 + $0x28] sm:$0xff] %v352
    %369 = vst [vmem:[#allocation2 + $0x30] sm:$0xff] %v353
    %370 = vst [vmem:[#allocation2 + $0x38] sm:$0xff] %v354
    %371 = vst [vmem:[#allocation2 + $0x40] sm:$0xff] %v355
    %372 = vst [vmem:[#allocation2 + $0x48] sm:$0xff] %v356
    %373 = vst [vmem:[#allocation2 + $0x50] sm:$0xff] %v357
    %374 = vst [vmem:[#allocation2 + $0x58] sm:$0xff] %v358
    %375 = vst [vmem:[#allocation2 + $0x60] sm:$0xff] %v359
    %376 = vst [vmem:[#allocation2 + $0x68] sm:$0xff] %v360
    %377 = vst [vmem:[#allocation2 + $0x70] sm:$0xff] %v361
    %378 = vst [vmem:[#allocation2 + $0x78] sm:$0xff] %v362
    // Predicated region
    $region46: #{tpu_custom_call.1} parent=1 // pred_check
      %p379 = pneg %p81
    $region47: #{tpu_custom_call.1} parent=1 // pred_check_branch
      %381 = sbr.rel (%p379) target = $region49
    $region48: #{tpu_custom_call.1} parent=1 // pred_region
      %v382 = vld [vmem:[#allocation2] sm:$0xff]
      %v383 = vld [vmem:[#allocation2 + $0x8] sm:$0xff]
      %v384 = vld [vmem:[#allocation2 + $0x10] sm:$0xff]
      %v385 = vld [vmem:[#allocation2 + $0x18] sm:$0xff]
      %v386 = vld [vmem:[#allocation2 + $0x20] sm:$0xff]
      %v387 = vld [vmem:[#allocation2 + $0x28] sm:$0xff]
      %v388 = vld [vmem:[#allocation2 + $0x30] sm:$0xff]
      %v389 = vld [vmem:[#allocation2 + $0x38] sm:$0xff]
      %v390 = vld [vmem:[#allocation2 + $0x40] sm:$0xff]
      %v391 = vld [vmem:[#allocation2 + $0x48] sm:$0xff]
      %v392 = vld [vmem:[#allocation2 + $0x50] sm:$0xff]
      %v393 = vld [vmem:[#allocation2 + $0x58] sm:$0xff]
      %v394 = vld [vmem:[#allocation2 + $0x60] sm:$0xff]
      %v395 = vld [vmem:[#allocation2 + $0x68] sm:$0xff]
      %v396 = vld [vmem:[#allocation2 + $0x70] sm:$0xff]
      %v397 = vld [vmem:[#allocation2 + $0x78] sm:$0xff]
      %v398 = vpack.c.bf16 %v383, %v382
      %v399 = vpack.c.bf16 %v385, %v384
      %v400 = vpack.c.bf16 %v387, %v386
      %v401 = vpack.c.bf16 %v389, %v388
      %v402 = vpack.c.bf16 %v391, %v390
      %v403 = vpack.c.bf16 %v393, %v392
      %v404 = vpack.c.bf16 %v395, %v394
      %v405 = vpack.c.bf16 %v397, %v396
      %v406 = vld [vmem:[#allocation9] sm:$0xff]
      %v407 = vld [vmem:[#allocation9 + $0x8] sm:$0xff]
      %v408 = vld [vmem:[#allocation9 + $0x10] sm:$0xff]
      %v409 = vld [vmem:[#allocation9 + $0x18] sm:$0xff]
      %v410 = vld [vmem:[#allocation9 + $0x20] sm:$0xff]
      %v411 = vld [vmem:[#allocation9 + $0x28] sm:$0xff]
      %v412 = vld [vmem:[#allocation9 + $0x30] sm:$0xff]
      %v413 = vld [vmem:[#allocation9 + $0x38] sm:$0xff]
      %v414 = vld [vmem:[#allocation9 + $0x40] sm:$0xff]
      %v415 = vld [vmem:[#allocation9 + $0x48] sm:$0xff]
      %v416 = vld [vmem:[#allocation9 + $0x50] sm:$0xff]
      %v417 = vld [vmem:[#allocation9 + $0x58] sm:$0xff]
      %v418 = vld [vmem:[#allocation9 + $0x60] sm:$0xff]
      %v419 = vld [vmem:[#allocation9 + $0x68] sm:$0xff]
      %v420 = vld [vmem:[#allocation9 + $0x70] sm:$0xff]
      %v421 = vld [vmem:[#allocation9 + $0x78] sm:$0xff]
      %v422 = vld [vmem:[#allocation9 + $0x80] sm:$0xff]
      %v423 = vld [vmem:[#allocation9 + $0x88] sm:$0xff]
      %v424 = vld [vmem:[#allocation9 + $0x90] sm:$0xff]
      %v425 = vld [vmem:[#allocation9 + $0x98] sm:$0xff]
      %v426 = vld [vmem:[#allocation9 + $0xa0] sm:$0xff]
      %v427 = vld [vmem:[#allocation9 + $0xa8] sm:$0xff]
      %v428 = vld [vmem:[#allocation9 + $0xb0] sm:$0xff]
      %v429 = vld [vmem:[#allocation9 + $0xb8] sm:$0xff]
      %v430 = vld [vmem:[#allocation9 + $0xc0] sm:$0xff]
      %v431 = vld [vmem:[#allocation9 + $0xc8] sm:$0xff]
      %v432 = vld [vmem:[#allocation9 + $0xd0] sm:$0xff]
      %v433 = vld [vmem:[#allocation9 + $0xd8] sm:$0xff]
      %v434 = vld [vmem:[#allocation9 + $0xe0] sm:$0xff]
      %v435 = vld [vmem:[#allocation9 + $0xe8] sm:$0xff]
      %v436 = vld [vmem:[#allocation9 + $0xf0] sm:$0xff]
      %v437 = vld [vmem:[#allocation9 + $0xf8] sm:$0xff]
      %v438 = vld [vmem:[%s4] sm:$0xf]
      %v440 = vlaneseq
      %v441 = vshrl.u32 %v440, 7
      %v442 = vsub.s32 0, %v441
      %v443 = vrot.slane %v438, %v442
      %v444 = vlaneseq
      %v445 = vshrl.u32 %v444, 7
      %v446 = vsub.s32 1, %v445
      %v447 = vrot.slane %v438, %v446
      %v448 = vlaneseq
      %v449 = vshrl.u32 %v448, 7
      %v450 = vsub.s32 2, %v449
      %v451 = vrot.slane %v438, %v450
      %v452 = vlaneseq
      %v453 = vshrl.u32 %v452, 7
      %v454 = vsub.s32 3, %v453
      %v455 = vrot.slane %v438, %v454
      %v492 = vunpack.c.l.b16 %v406
      %v493 = vunpack.c.h.b16 %v406
      %v494 = vunpack.c.l.b16 %v407
      %v495 = vunpack.c.h.b16 %v407
      %v496 = vunpack.c.l.b16 %v408
      %v497 = vunpack.c.h.b16 %v408
      %v498 = vunpack.c.l.b16 %v409
      %v499 = vunpack.c.h.b16 %v409
      %v500 = vunpack.c.l.b16 %v410
      %v501 = vunpack.c.h.b16 %v410
      %v502 = vunpack.c.l.b16 %v411
      %v503 = vunpack.c.h.b16 %v411
      %v504 = vunpack.c.l.b16 %v412
      %v505 = vunpack.c.h.b16 %v412
      %v506 = vunpack.c.l.b16 %v413
      %v507 = vunpack.c.h.b16 %v413
      %v508 = vunpack.c.l.b16 %v414
      %v509 = vunpack.c.h.b16 %v414
      %v510 = vunpack.c.l.b16 %v415
      %v511 = vunpack.c.h.b16 %v415
      %v512 = vunpack.c.l.b16 %v416
      %v513 = vunpack.c.h.b16 %v416
      %v514 = vunpack.c.l.b16 %v417
      %v515 = vunpack.c.h.b16 %v417
      %v516 = vunpack.c.l.b16 %v418
      %v517 = vunpack.c.h.b16 %v418
      %v518 = vunpack.c.l.b16 %v419
      %v519 = vunpack.c.h.b16 %v419
      %v520 = vunpack.c.l.b16 %v420
      %v521 = vunpack.c.h.b16 %v420
      %v522 = vunpack.c.l.b16 %v421
      %v523 = vunpack.c.h.b16 %v421
      %v524 = vunpack.c.l.b16 %v422
      %v525 = vunpack.c.h.b16 %v422
      %v526 = vunpack.c.l.b16 %v423
      %v527 = vunpack.c.h.b16 %v423
      %v528 = vunpack.c.l.b16 %v424
      %v529 = vunpack.c.h.b16 %v424
      %v530 = vunpack.c.l.b16 %v425
      %v531 = vunpack.c.h.b16 %v425
      %v532 = vunpack.c.l.b16 %v426
      %v533 = vunpack.c.h.b16 %v426
      %v534 = vunpack.c.l.b16 %v427
      %v535 = vunpack.c.h.b16 %v427
      %v536 = vunpack.c.l.b16 %v428
      %v537 = vunpack.c.h.b16 %v428
      %v538 = vunpack.c.l.b16 %v429
      %v539 = vunpack.c.h.b16 %v429
      %v540 = vunpack.c.l.b16 %v430
      %v541 = vunpack.c.h.b16 %v430
      %v542 = vunpack.c.l.b16 %v431
      %v543 = vunpack.c.h.b16 %v431
      %v544 = vunpack.c.l.b16 %v432
      %v545 = vunpack.c.h.b16 %v432
      %v546 = vunpack.c.l.b16 %v433
      %v547 = vunpack.c.h.b16 %v433
      %v548 = vunpack.c.l.b16 %v434
      %v549 = vunpack.c.h.b16 %v434
      %v550 = vunpack.c.l.b16 %v435
      %v551 = vunpack.c.h.b16 %v435
      %v552 = vunpack.c.l.b16 %v436
      %v553 = vunpack.c.h.b16 %v436
      %v554 = vunpack.c.l.b16 %v437
      %v555 = vunpack.c.h.b16 %v437
      %v556 = vpack.c.b16 %v496, %v492
      %v557 = vpack.c.b16 %v497, %v493
      %v558 = vpack.c.b16 %v498, %v494
      %v559 = vpack.c.b16 %v499, %v495
      %v560 = vpack.c.b16 %v504, %v500
      %v561 = vpack.c.b16 %v505, %v501
      %v562 = vpack.c.b16 %v506, %v502
      %v563 = vpack.c.b16 %v507, %v503
      %v564 = vpack.c.b16 %v512, %v508
      %v565 = vpack.c.b16 %v513, %v509
      %v566 = vpack.c.b16 %v514, %v510
      %v567 = vpack.c.b16 %v515, %v511
      %v568 = vpack.c.b16 %v520, %v516
      %v569 = vpack.c.b16 %v521, %v517
      %v570 = vpack.c.b16 %v522, %v518
      %v571 = vpack.c.b16 %v523, %v519
      %v572 = vpack.c.b16 %v528, %v524
      %v573 = vpack.c.b16 %v529, %v525
      %v574 = vpack.c.b16 %v530, %v526
      %v575 = vpack.c.b16 %v531, %v527
      %v576 = vpack.c.b16 %v536, %v532
      %v577 = vpack.c.b16 %v537, %v533
      %v578 = vpack.c.b16 %v538, %v534
      %v579 = vpack.c.b16 %v539, %v535
      %v580 = vpack.c.b16 %v544, %v540
      %v581 = vpack.c.b16 %v545, %v541
      %v582 = vpack.c.b16 %v546, %v542
      %v583 = vpack.c.b16 %v547, %v543
      %v584 = vpack.c.b16 %v552, %v548
      %v585 = vpack.c.b16 %v553, %v549
      %v586 = vpack.c.b16 %v554, %v550
      %v587 = vpack.c.b16 %v555, %v551
      %620 = vmatprep.subr.bf16.mxu0 %v557
      %621 = vmatpush1.bf16.msra.mxu0 %v556
      %622 = vmatprep.subr.bf16.mxu0 %v561
      %623 = vmatpush1.bf16.msra.mxu0 %v560
      %624 = vmatprep.subr.bf16.mxu0 %v565
      %625 = vmatpush1.bf16.msra.mxu0 %v564
      %626 = vmatprep.subr.bf16.mxu0 %v569
      %627 = vmatpush1.bf16.msra.mxu0 %v568
      %628 = vmatprep.subr.bf16.mxu0 %v573
      %629 = vmatpush1.bf16.msra.mxu0 %v572
      %630 = vmatprep.subr.bf16.mxu0 %v577
      %631 = vmatpush1.bf16.msra.mxu0 %v576
      %632 = vmatprep.subr.bf16.mxu0 %v581
      %633 = vmatpush1.bf16.msra.mxu0 %v580
      %634 = vmatprep.subr.bf16.mxu0 %v585
      %635 = vmatpush1.bf16.msra.mxu0 %v584
      %636 = vmatprep.subr.bf16.mxu0 0
      %637 = vmatpush1.bf16.msra.mxu0 0
      %638 = vmatprep.subr.bf16.mxu0 0
      %639 = vmatpush1.bf16.msra.mxu0 0
      %640 = vmatprep.subr.bf16.mxu0 0
      %641 = vmatpush1.bf16.msra.mxu0 0
      %642 = vmatprep.subr.bf16.mxu0 0
      %643 = vmatpush1.bf16.msra.mxu0 0
      %644 = vmatprep.subr.bf16.mxu0 0
      %645 = vmatpush1.bf16.msra.mxu0 0
      %646 = vmatprep.subr.bf16.mxu0 0
      %647 = vmatpush1.bf16.msra.mxu0 0
      %648 = vmatprep.subr.bf16.mxu0 0
      %649 = vmatpush1.bf16.msra.mxu0 0
      %650 = vmatprep.subr.bf16.mxu0 0
      %651 = vmatpush1.bf16.msra.mxu0 0
      %652 = vmatprep.mubr.bf16.mxu0 0
      %653 = vmatmul.mubr.bf16.gmra.mrb[0].mxu0 %v398
      %v654 = vpop.f32.mrb[0].mxu0
      %v655 = vadd.f32 %v443, %v654
      %v656 = vpop.f32.mrb[0].mxu0
      %v657 = vadd.f32 %v447, %v656
      %v658 = vpop.f32.mrb[0].mxu0
      %v659 = vadd.f32 %v443, %v658
      %v660 = vpop.f32.mrb[0].mxu0
      %v661 = vadd.f32 %v447, %v660
      %662 = vmatprep.mubr.bf16.mxu0 0
      %663 = vmatmul.mubr.bf16.gmra.mrb[0].mxu0 %v399
      %v664 = vpop.f32.mrb[0].mxu0
      %v665 = vadd.f32 %v443, %v664
      %v666 = vpop.f32.mrb[0].mxu0
      %v667 = vadd.f32 %v447, %v666
      %v668 = vpop.f32.mrb[0].mxu0
      %v669 = vadd.f32 %v443, %v668
      %v670 = vpop.f32.mrb[0].mxu0
      %v671 = vadd.f32 %v447, %v670
      %672 = vmatprep.mubr.bf16.mxu0 0
      %673 = vmatmul.mubr.bf16.gmra.mrb[0].mxu0 %v400
      %v674 = vpop.f32.mrb[0].mxu0
      %v675 = vadd.f32 %v443, %v674
      %v676 = vpop.f32.mrb[0].mxu0
      %v677 = vadd.f32 %v447, %v676
      %v678 = vpop.f32.mrb[0].mxu0
      %v679 = vadd.f32 %v443, %v678
      %v680 = vpop.f32.mrb[0].mxu0
      %v681 = vadd.f32 %v447, %v680
      %682 = vmatprep.mubr.bf16.mxu0 0
      %683 = vmatmul.mubr.bf16.gmra.mrb[0].mxu0 %v401
      %v684 = vpop.f32.mrb[0].mxu0
      %v685 = vadd.f32 %v443, %v684
      %v686 = vpop.f32.mrb[0].mxu0
      %v687 = vadd.f32 %v447, %v686
      %v688 = vpop.f32.mrb[0].mxu0
      %v689 = vadd.f32 %v443, %v688
      %v690 = vpop.f32.mrb[0].mxu0
      %v691 = vadd.f32 %v447, %v690
      %692 = vmatprep.mubr.bf16.mxu0 0
      %693 = vmatmul.mubr.bf16.gmra.mrb[0].mxu0 %v402
      %v694 = vpop.f32.mrb[0].mxu0
      %v695 = vadd.f32 %v443, %v694
      %v696 = vpop.f32.mrb[0].mxu0
      %v697 = vadd.f32 %v447, %v696
      %v698 = vpop.f32.mrb[0].mxu0
      %v699 = vadd.f32 %v443, %v698
      %v700 = vpop.f32.mrb[0].mxu0
      %v701 = vadd.f32 %v447, %v700
      %702 = vmatprep.mubr.bf16.mxu0 0
      %703 = vmatmul.mubr.bf16.gmra.mrb[0].mxu0 %v403
      %v704 = vpop.f32.mrb[0].mxu0
      %v705 = vadd.f32 %v443, %v704
      %v706 = vpop.f32.mrb[0].mxu0
      %v707 = vadd.f32 %v447, %v706
      %v708 = vpop.f32.mrb[0].mxu0
      %v709 = vadd.f32 %v443, %v708
      %v710 = vpop.f32.mrb[0].mxu0
      %v711 = vadd.f32 %v447, %v710
      %712 = vmatprep.mubr.bf16.mxu0 0
      %713 = vmatmul.mubr.bf16.gmra.mrb[0].mxu0 %v404
      %v714 = vpop.f32.mrb[0].mxu0
      %v715 = vadd.f32 %v443, %v714
      %v716 = vpop.f32.mrb[0].mxu0
      %v717 = vadd.f32 %v447, %v716
      %v718 = vpop.f32.mrb[0].mxu0
      %v719 = vadd.f32 %v443, %v718
      %v720 = vpop.f32.mrb[0].mxu0
      %v721 = vadd.f32 %v447, %v720
      %722 = vmatprep.mubr.bf16.mxu0 0
      %723 = vmatmul.mubr.bf16.gmra.mrb[0].mxu0 %v405
      %v724 = vpop.f32.mrb[0].mxu0
      %v725 = vadd.f32 %v443, %v724
      %v726 = vpop.f32.mrb[0].mxu0
      %v727 = vadd.f32 %v447, %v726
      %v728 = vpop.f32.mrb[0].mxu0
      %v729 = vadd.f32 %v443, %v728
      %v730 = vpop.f32.mrb[0].mxu0
      %v731 = vadd.f32 %v447, %v730
      %732 = vdwg.mxu0
      %733 = vmatprep.subr.bf16.mxu0 %v559
      %734 = vmatpush1.bf16.msra.mxu0 %v558
      %735 = vmatprep.subr.bf16.mxu0 %v563
      %736 = vmatpush1.bf16.msra.mxu0 %v562
      %737 = vmatprep.subr.bf16.mxu0 %v567
      %738 = vmatpush1.bf16.msra.mxu0 %v566
      %739 = vmatprep.subr.bf16.mxu0 %v571
      %740 = vmatpush1.bf16.msra.mxu0 %v570
      %741 = vmatprep.subr.bf16.mxu0 %v575
      %742 = vmatpush1.bf16.msra.mxu0 %v574
      %743 = vmatprep.subr.bf16.mxu0 %v579
      %744 = vmatpush1.bf16.msra.mxu0 %v578
      %745 = vmatprep.subr.bf16.mxu0 %v583
      %746 = vmatpush1.bf16.msra.mxu0 %v582
      %747 = vmatprep.subr.bf16.mxu0 %v587
      %748 = vmatpush1.bf16.msra.mxu0 %v586
      %749 = vmatprep.subr.bf16.mxu0 0
      %750 = vmatpush1.bf16.msra.mxu0 0
      %751 = vmatprep.subr.bf16.mxu0 0
      %752 = vmatpush1.bf16.msra.mxu0 0
      %753 = vmatprep.subr.bf16.mxu0 0
      %754 = vmatpush1.bf16.msra.mxu0 0
      %755 = vmatprep.subr.bf16.mxu0 0
      %756 = vmatpush1.bf16.msra.mxu0 0
      %757 = vmatprep.subr.bf16.mxu0 0
      %758 = vmatpush1.bf16.msra.mxu0 0
      %759 = vmatprep.subr.bf16.mxu0 0
      %760 = vmatpush1.bf16.msra.mxu0 0
      %761 = vmatprep.subr.bf16.mxu0 0
      %762 = vmatpush1.bf16.msra.mxu0 0
      %763 = vmatprep.subr.bf16.mxu0 0
      %764 = vmatpush1.bf16.msra.mxu0 0
      %765 = vmatprep.mubr.bf16.mxu0 0
      %766 = vmatmul.mubr.bf16.gmra.mrb[0].mxu0 %v398
      %v767 = vpop.f32.mrb[0].mxu0
      %v768 = vadd.f32 %v451, %v767
      %v769 = vpop.f32.mrb[0].mxu0
      %v770 = vadd.f32 %v455, %v769
      %v771 = vpop.f32.mrb[0].mxu0
      %v772 = vadd.f32 %v451, %v771
      %v773 = vpop.f32.mrb[0].mxu0
      %v774 = vadd.f32 %v455, %v773
      %775 = vmatprep.mubr.bf16.mxu0 0
      %776 = vmatmul.mubr.bf16.gmra.mrb[0].mxu0 %v399
      %v777 = vpop.f32.mrb[0].mxu0
      %v778 = vadd.f32 %v451, %v777
      %v779 = vpop.f32.mrb[0].mxu0
      %v780 = vadd.f32 %v455, %v779
      %v781 = vpop.f32.mrb[0].mxu0
      %v782 = vadd.f32 %v451, %v781
      %v783 = vpop.f32.mrb[0].mxu0
      %v784 = vadd.f32 %v455, %v783
      %785 = vmatprep.mubr.bf16.mxu0 0
      %786 = vmatmul.mubr.bf16.gmra.mrb[0].mxu0 %v400
      %v787 = vpop.f32.mrb[0].mxu0
      %v788 = vadd.f32 %v451, %v787
      %v789 = vpop.f32.mrb[0].mxu0
      %v790 = vadd.f32 %v455, %v789
      %v791 = vpop.f32.mrb[0].mxu0
      %v792 = vadd.f32 %v451, %v791
      %v793 = vpop.f32.mrb[0].mxu0
      %v794 = vadd.f32 %v455, %v793
      %795 = vmatprep.mubr.bf16.mxu0 0
      %796 = vmatmul.mubr.bf16.gmra.mrb[0].mxu0 %v401
      %v797 = vpop.f32.mrb[0].mxu0
      %v798 = vadd.f32 %v451, %v797
      %v799 = vpop.f32.mrb[0].mxu0
      %v800 = vadd.f32 %v455, %v799
      %v801 = vpop.f32.mrb[0].mxu0
      %v802 = vadd.f32 %v451, %v801
      %v803 = vpop.f32.mrb[0].mxu0
      %v804 = vadd.f32 %v455, %v803
      %805 = vmatprep.mubr.bf16.mxu0 0
      %806 = vmatmul.mubr.bf16.gmra.mrb[0].mxu0 %v402
      %v807 = vpop.f32.mrb[0].mxu0
      %v808 = vadd.f32 %v451, %v807
      %v809 = vpop.f32.mrb[0].mxu0
      %v810 = vadd.f32 %v455, %v809
      %v811 = vpop.f32.mrb[0].mxu0
      %v812 = vadd.f32 %v451, %v811
      %v813 = vpop.f32.mrb[0].mxu0
      %v814 = vadd.f32 %v455, %v813
      %815 = vmatprep.mubr.bf16.mxu0 0
      %816 = vmatmul.mubr.bf16.gmra.mrb[0].mxu0 %v403
      %v817 = vpop.f32.mrb[0].mxu0
      %v818 = vadd.f32 %v451, %v817
      %v819 = vpop.f32.mrb[0].mxu0
      %v820 = vadd.f32 %v455, %v819
      %v821 = vpop.f32.mrb[0].mxu0
      %v822 = vadd.f32 %v451, %v821
      %v823 = vpop.f32.mrb[0].mxu0
      %v824 = vadd.f32 %v455, %v823
      %825 = vmatprep.mubr.bf16.mxu0 0
      %826 = vmatmul.mubr.bf16.gmra.mrb[0].mxu0 %v404
      %v827 = vpop.f32.mrb[0].mxu0
      %v828 = vadd.f32 %v451, %v827
      %v829 = vpop.f32.mrb[0].mxu0
      %v830 = vadd.f32 %v455, %v829
      %v831 = vpop.f32.mrb[0].mxu0
      %v832 = vadd.f32 %v451, %v831
      %v833 = vpop.f32.mrb[0].mxu0
      %v834 = vadd.f32 %v455, %v833
      %835 = vmatprep.mubr.bf16.mxu0 0
      %836 = vmatmul.mubr.bf16.gmra.mrb[0].mxu0 %v405
      %v837 = vpop.f32.mrb[0].mxu0
      %v838 = vadd.f32 %v451, %v837
      %v839 = vpop.f32.mrb[0].mxu0
      %v840 = vadd.f32 %v455, %v839
      %v841 = vpop.f32.mrb[0].mxu0
      %v842 = vadd.f32 %v451, %v841
      %v843 = vpop.f32.mrb[0].mxu0
      %v844 = vadd.f32 %v455, %v843
      %845 = vdwg.mxu0
      %v846 = vmax.f32 %v655, 0.0
      %v847 = vmax.f32 %v657, 0.0
      %v848 = vmax.f32 %v768, 0.0
      %v849 = vmax.f32 %v770, 0.0
      %v850 = vmax.f32 %v659, 0.0
      %v851 = vmax.f32 %v661, 0.0
      %v852 = vmax.f32 %v772, 0.0
      %v853 = vmax.f32 %v774, 0.0
      %v854 = vmax.f32 %v665, 0.0
      %v855 = vmax.f32 %v667, 0.0
      %v856 = vmax.f32 %v778, 0.0
      %v857 = vmax.f32 %v780, 0.0
      %v858 = vmax.f32 %v669, 0.0
      %v859 = vmax.f32 %v671, 0.0
      %v860 = vmax.f32 %v782, 0.0
      %v861 = vmax.f32 %v784, 0.0
      %v862 = vmax.f32 %v675, 0.0
      %v863 = vmax.f32 %v677, 0.0
      %v864 = vmax.f32 %v788, 0.0
      %v865 = vmax.f32 %v790, 0.0
      %v866 = vmax.f32 %v679, 0.0
      %v867 = vmax.f32 %v681, 0.0
      %v868 = vmax.f32 %v792, 0.0
      %v869 = vmax.f32 %v794, 0.0
      %v870 = vmax.f32 %v685, 0.0
      %v871 = vmax.f32 %v687, 0.0
      %v872 = vmax.f32 %v798, 0.0
      %v873 = vmax.f32 %v800, 0.0
      %v874 = vmax.f32 %v689, 0.0
      %v875 = vmax.f32 %v691, 0.0
      %v876 = vmax.f32 %v802, 0.0
      %v877 = vmax.f32 %v804, 0.0
      %v878 = vmax.f32 %v695, 0.0
      %v879 = vmax.f32 %v697, 0.0
      %v880 = vmax.f32 %v808, 0.0
      %v881 = vmax.f32 %v810, 0.0
      %v882 = vmax.f32 %v699, 0.0
      %v883 = vmax.f32 %v701, 0.0
      %v884 = vmax.f32 %v812, 0.0
      %v885 = vmax.f32 %v814, 0.0
      %v886 = vmax.f32 %v705, 0.0
      %v887 = vmax.f32 %v707, 0.0
      %v888 = vmax.f32 %v818, 0.0
      %v889 = vmax.f32 %v820, 0.0
      %v890 = vmax.f32 %v709, 0.0
      %v891 = vmax.f32 %v711, 0.0
      %v892 = vmax.f32 %v822, 0.0
      %v893 = vmax.f32 %v824, 0.0
      %v894 = vmax.f32 %v715, 0.0
      %v895 = vmax.f32 %v717, 0.0
      %v896 = vmax.f32 %v828, 0.0
      %v897 = vmax.f32 %v830, 0.0
      %v898 = vmax.f32 %v719, 0.0
      %v899 = vmax.f32 %v721, 0.0
      %v900 = vmax.f32 %v832, 0.0
      %v901 = vmax.f32 %v834, 0.0
      %v902 = vmax.f32 %v725, 0.0
      %v903 = vmax.f32 %v727, 0.0
      %v904 = vmax.f32 %v838, 0.0
      %v905 = vmax.f32 %v840, 0.0
      %v906 = vmax.f32 %v729, 0.0
      %v907 = vmax.f32 %v731, 0.0
      %v908 = vmax.f32 %v842, 0.0
      %v909 = vmax.f32 %v844, 0.0
      %v910 = vlaneseq
      %v911 = vshrl.u32 %v910, 7
      %v912 = vadd.s32 %v911, 8
      %v913 = vadd.s32 %v911, 16
      %v914 = vadd.s32 %v911, 24
      %v915 = vadd.s32 %v911, 32
      %v916 = vadd.s32 %v911, 40
      %v917 = vadd.s32 %v911, 48
      %v918 = vadd.s32 %v911, 56
      %v919 = vadd.s32 %v911, 64
      %v920 = vadd.s32 %v911, 72
      %v921 = vadd.s32 %v911, 80
      %v922 = vadd.s32 %v911, 88
      %v923 = vadd.s32 %v911, 96
      %v924 = vadd.s32 %v911, 104
      %v925 = vadd.s32 %v911, 112
      %v926 = vadd.s32 %v911, 120
      %v927 = vlaneseq
      %v928 = vand.u32 %v927, 127
      %v929 = vadd.s32 %v928, 128
      %v930 = vadd.s32 %v928, 256
      %v931 = vadd.s32 %v928, 384
      %s932 = smul.u32 0, 128
      %v933 = vstv %s932
      %v934 = vadd.s32 %v911, %v933
      %v935 = vadd.s32 %v912, %v933
      %v936 = vadd.s32 %v913, %v933
      %v937 = vadd.s32 %v914, %v933
      %v938 = vadd.s32 %v915, %v933
      %v939 = vadd.s32 %v916, %v933
      %v940 = vadd.s32 %v917, %v933
      %v941 = vadd.s32 %v918, %v933
      %v942 = vadd.s32 %v919, %v933
      %v943 = vadd.s32 %v920, %v933
      %v944 = vadd.s32 %v921, %v933
      %v945 = vadd.s32 %v922, %v933
      %v946 = vadd.s32 %v923, %v933
      %v947 = vadd.s32 %v924, %v933
      %v948 = vadd.s32 %v925, %v933
      %v949 = vadd.s32 %v926, %v933
      %v950 = vmul.u32 %v934, 512
      %v951 = vmul.u32 %v935, 512
      %v952 = vmul.u32 %v936, 512
      %v953 = vmul.u32 %v937, 512
      %v954 = vmul.u32 %v938, 512
      %v955 = vmul.u32 %v939, 512
      %v956 = vmul.u32 %v940, 512
      %v957 = vmul.u32 %v941, 512
      %v958 = vmul.u32 %v942, 512
      %v959 = vmul.u32 %v943, 512
      %v960 = vmul.u32 %v944, 512
      %v961 = vmul.u32 %v945, 512
      %v962 = vmul.u32 %v946, 512
      %v963 = vmul.u32 %v947, 512
      %v964 = vmul.u32 %v948, 512
      %v965 = vmul.u32 %v949, 512
      %v966 = vadd.s32 %v950, %v928
      %v967 = vadd.s32 %v950, %v929
      %v968 = vadd.s32 %v950, %v930
      %v969 = vadd.s32 %v950, %v931
      %v970 = vadd.s32 %v951, %v928
      %v971 = vadd.s32 %v951, %v929
      %v972 = vadd.s32 %v951, %v930
      %v973 = vadd.s32 %v951, %v931
      %v974 = vadd.s32 %v952, %v928
      %v975 = vadd.s32 %v952, %v929
      %v976 = vadd.s32 %v952, %v930
      %v977 = vadd.s32 %v952, %v931
      %v978 = vadd.s32 %v953, %v928
      %v979 = vadd.s32 %v953, %v929
      %v980 = vadd.s32 %v953, %v930
      %v981 = vadd.s32 %v953, %v931
      %v982 = vadd.s32 %v954, %v928
      %v983 = vadd.s32 %v954, %v929
      %v984 = vadd.s32 %v954, %v930
      %v985 = vadd.s32 %v954, %v931
      %v986 = vadd.s32 %v955, %v928
      %v987 = vadd.s32 %v955, %v929
      %v988 = vadd.s32 %v955, %v930
      %v989 = vadd.s32 %v955, %v931
      %v990 = vadd.s32 %v956, %v928
      %v991 = vadd.s32 %v956, %v929
      %v992 = vadd.s32 %v956, %v930
      %v993 = vadd.s32 %v956, %v931
      %v994 = vadd.s32 %v957, %v928
      %v995 = vadd.s32 %v957, %v929
      %v996 = vadd.s32 %v957, %v930
      %v997 = vadd.s32 %v957, %v931
      %v998 = vadd.s32 %v958, %v928
      %v999 = vadd.s32 %v958, %v929
      %v1000 = vadd.s32 %v958, %v930
      %v1001 = vadd.s32 %v958, %v931
      %v1002 = vadd.s32 %v959, %v928
      %v1003 = vadd.s32 %v959, %v929
      %v1004 = vadd.s32 %v959, %v930
      %v1005 = vadd.s32 %v959, %v931
      %v1006 = vadd.s32 %v960, %v928
      %v1007 = vadd.s32 %v960, %v929
      %v1008 = vadd.s32 %v960, %v930
      %v1009 = vadd.s32 %v960, %v931
      %v1010 = vadd.s32 %v961, %v928
      %v1011 = vadd.s32 %v961, %v929
      %v1012 = vadd.s32 %v961, %v930
      %v1013 = vadd.s32 %v961, %v931
      %v1014 = vadd.s32 %v962, %v928
      %v1015 = vadd.s32 %v962, %v929
      %v1016 = vadd.s32 %v962, %v930
      %v1017 = vadd.s32 %v962, %v931
      %v1018 = vadd.s32 %v963, %v928
      %v1019 = vadd.s32 %v963, %v929
      %v1020 = vadd.s32 %v963, %v930
      %v1021 = vadd.s32 %v963, %v931
      %v1022 = vadd.s32 %v964, %v928
      %v1023 = vadd.s32 %v964, %v929
      %v1024 = vadd.s32 %v964, %v930
      %v1025 = vadd.s32 %v964, %v931
      %v1026 = vadd.s32 %v965, %v928
      %v1027 = vadd.s32 %v965, %v929
      %v1028 = vadd.s32 %v965, %v930
      %v1029 = vadd.s32 %v965, %v931
      %s1030 = sld [smem:[#allocation3]]
      %s1031 = smul.u32 %s1030, 2654435769
      %v1032 = vstv %s1031
      %v1033 = vxor.u32 %v966, %v1032
      %v1034 = vxor.u32 %v967, %v1032
      %v1035 = vxor.u32 %v968, %v1032
      %v1036 = vxor.u32 %v969, %v1032
      %v1037 = vxor.u32 %v970, %v1032
      %v1038 = vxor.u32 %v971, %v1032
      %v1039 = vxor.u32 %v972, %v1032
      %v1040 = vxor.u32 %v973, %v1032
      %v1041 = vxor.u32 %v974, %v1032
      %v1042 = vxor.u32 %v975, %v1032
      %v1043 = vxor.u32 %v976, %v1032
      %v1044 = vxor.u32 %v977, %v1032
      %v1045 = vxor.u32 %v978, %v1032
      %v1046 = vxor.u32 %v979, %v1032
      %v1047 = vxor.u32 %v980, %v1032
      %v1048 = vxor.u32 %v981, %v1032
      %v1049 = vxor.u32 %v982, %v1032
      %v1050 = vxor.u32 %v983, %v1032
      %v1051 = vxor.u32 %v984, %v1032
      %v1052 = vxor.u32 %v985, %v1032
      %v1053 = vxor.u32 %v986, %v1032
      %v1054 = vxor.u32 %v987, %v1032
      %v1055 = vxor.u32 %v988, %v1032
      %v1056 = vxor.u32 %v989, %v1032
      %v1057 = vxor.u32 %v990, %v1032
      %v1058 = vxor.u32 %v991, %v1032
      %v1059 = vxor.u32 %v992, %v1032
      %v1060 = vxor.u32 %v993, %v1032
      %v1061 = vxor.u32 %v994, %v1032
      %v1062 = vxor.u32 %v995, %v1032
      %v1063 = vxor.u32 %v996, %v1032
      %v1064 = vxor.u32 %v997, %v1032
      %v1065 = vxor.u32 %v998, %v1032
      %v1066 = vxor.u32 %v999, %v1032
      %v1067 = vxor.u32 %v1000, %v1032
      %v1068 = vxor.u32 %v1001, %v1032
      %v1069 = vxor.u32 %v1002, %v1032
      %v1070 = vxor.u32 %v1003, %v1032
      %v1071 = vxor.u32 %v1004, %v1032
      %v1072 = vxor.u32 %v1005, %v1032
      %v1073 = vxor.u32 %v1006, %v1032
      %v1074 = vxor.u32 %v1007, %v1032
      %v1075 = vxor.u32 %v1008, %v1032
      %v1076 = vxor.u32 %v1009, %v1032
      %v1077 = vxor.u32 %v1010, %v1032
      %v1078 = vxor.u32 %v1011, %v1032
      %v1079 = vxor.u32 %v1012, %v1032
      %v1080 = vxor.u32 %v1013, %v1032
      %v1081 = vxor.u32 %v1014, %v1032
      %v1082 = vxor.u32 %v1015, %v1032
      %v1083 = vxor.u32 %v1016, %v1032
      %v1084 = vxor.u32 %v1017, %v1032
      %v1085 = vxor.u32 %v1018, %v1032
      %v1086 = vxor.u32 %v1019, %v1032
      %v1087 = vxor.u32 %v1020, %v1032
      %v1088 = vxor.u32 %v1021, %v1032
      %v1089 = vxor.u32 %v1022, %v1032
      %v1090 = vxor.u32 %v1023, %v1032
      %v1091 = vxor.u32 %v1024, %v1032
      %v1092 = vxor.u32 %v1025, %v1032
      %v1093 = vxor.u32 %v1026, %v1032
      %v1094 = vxor.u32 %v1027, %v1032
      %v1095 = vxor.u32 %v1028, %v1032
      %v1096 = vxor.u32 %v1029, %v1032
      %v1097 = vshrl.u32 %v1033, 16
      %v1098 = vshrl.u32 %v1034, 16
      %v1099 = vshrl.u32 %v1035, 16
      %v1100 = vshrl.u32 %v1036, 16
      %v1101 = vshrl.u32 %v1037, 16
      %v1102 = vshrl.u32 %v1038, 16
      %v1103 = vshrl.u32 %v1039, 16
      %v1104 = vshrl.u32 %v1040, 16
      %v1105 = vshrl.u32 %v1041, 16
      %v1106 = vshrl.u32 %v1042, 16
      %v1107 = vshrl.u32 %v1043, 16
      %v1108 = vshrl.u32 %v1044, 16
      %v1109 = vshrl.u32 %v1045, 16
      %v1110 = vshrl.u32 %v1046, 16
      %v1111 = vshrl.u32 %v1047, 16
      %v1112 = vshrl.u32 %v1048, 16
      %v1113 = vshrl.u32 %v1049, 16
      %v1114 = vshrl.u32 %v1050, 16
      %v1115 = vshrl.u32 %v1051, 16
      %v1116 = vshrl.u32 %v1052, 16
      %v1117 = vshrl.u32 %v1053, 16
      %v1118 = vshrl.u32 %v1054, 16
      %v1119 = vshrl.u32 %v1055, 16
      %v1120 = vshrl.u32 %v1056, 16
      %v1121 = vshrl.u32 %v1057, 16
      %v1122 = vshrl.u32 %v1058, 16
      %v1123 = vshrl.u32 %v1059, 16
      %v1124 = vshrl.u32 %v1060, 16
      %v1125 = vshrl.u32 %v1061, 16
      %v1126 = vshrl.u32 %v1062, 16
      %v1127 = vshrl.u32 %v1063, 16
      %v1128 = vshrl.u32 %v1064, 16
      %v1129 = vshrl.u32 %v1065, 16
      %v1130 = vshrl.u32 %v1066, 16
      %v1131 = vshrl.u32 %v1067, 16
      %v1132 = vshrl.u32 %v1068, 16
      %v1133 = vshrl.u32 %v1069, 16
      %v1134 = vshrl.u32 %v1070, 16
      %v1135 = vshrl.u32 %v1071, 16
      %v1136 = vshrl.u32 %v1072, 16
      %v1137 = vshrl.u32 %v1073, 16
      %v1138 = vshrl.u32 %v1074, 16
      %v1139 = vshrl.u32 %v1075, 16
      %v1140 = vshrl.u32 %v1076, 16
      %v1141 = vshrl.u32 %v1077, 16
      %v1142 = vshrl.u32 %v1078, 16
      %v1143 = vshrl.u32 %v1079, 16
      %v1144 = vshrl.u32 %v1080, 16
      %v1145 = vshrl.u32 %v1081, 16
      %v1146 = vshrl.u32 %v1082, 16
      %v1147 = vshrl.u32 %v1083, 16
      %v1148 = vshrl.u32 %v1084, 16
      %v1149 = vshrl.u32 %v1085, 16
      %v1150 = vshrl.u32 %v1086, 16
      %v1151 = vshrl.u32 %v1087, 16
      %v1152 = vshrl.u32 %v1088, 16
      %v1153 = vshrl.u32 %v1089, 16
      %v1154 = vshrl.u32 %v1090, 16
      %v1155 = vshrl.u32 %v1091, 16
      %v1156 = vshrl.u32 %v1092, 16
      %v1157 = vshrl.u32 %v1093, 16
      %v1158 = vshrl.u32 %v1094, 16
      %v1159 = vshrl.u32 %v1095, 16
      %v1160 = vshrl.u32 %v1096, 16
      %v1161 = vxor.u32 %v1033, %v1097
      %v1162 = vxor.u32 %v1034, %v1098
      %v1163 = vxor.u32 %v1035, %v1099
      %v1164 = vxor.u32 %v1036, %v1100
      %v1165 = vxor.u32 %v1037, %v1101
      %v1166 = vxor.u32 %v1038, %v1102
      %v1167 = vxor.u32 %v1039, %v1103
      %v1168 = vxor.u32 %v1040, %v1104
      %v1169 = vxor.u32 %v1041, %v1105
      %v1170 = vxor.u32 %v1042, %v1106
      %v1171 = vxor.u32 %v1043, %v1107
      %v1172 = vxor.u32 %v1044, %v1108
      %v1173 = vxor.u32 %v1045, %v1109
      %v1174 = vxor.u32 %v1046, %v1110
      %v1175 = vxor.u32 %v1047, %v1111
      %v1176 = vxor.u32 %v1048, %v1112
      %v1177 = vxor.u32 %v1049, %v1113
      %v1178 = vxor.u32 %v1050, %v1114
      %v1179 = vxor.u32 %v1051, %v1115
      %v1180 = vxor.u32 %v1052, %v1116
      %v1181 = vxor.u32 %v1053, %v1117
      %v1182 = vxor.u32 %v1054, %v1118
      %v1183 = vxor.u32 %v1055, %v1119
      %v1184 = vxor.u32 %v1056, %v1120
      %v1185 = vxor.u32 %v1057, %v1121
      %v1186 = vxor.u32 %v1058, %v1122
      %v1187 = vxor.u32 %v1059, %v1123
      %v1188 = vxor.u32 %v1060, %v1124
      %v1189 = vxor.u32 %v1061, %v1125
      %v1190 = vxor.u32 %v1062, %v1126
      %v1191 = vxor.u32 %v1063, %v1127
      %v1192 = vxor.u32 %v1064, %v1128
      %v1193 = vxor.u32 %v1065, %v1129
      %v1194 = vxor.u32 %v1066, %v1130
      %v1195 = vxor.u32 %v1067, %v1131
      %v1196 = vxor.u32 %v1068, %v1132
      %v1197 = vxor.u32 %v1069, %v1133
      %v1198 = vxor.u32 %v1070, %v1134
      %v1199 = vxor.u32 %v1071, %v1135
      %v1200 = vxor.u32 %v1072, %v1136
      %v1201 = vxor.u32 %v1073, %v1137
      %v1202 = vxor.u32 %v1074, %v1138
      %v1203 = vxor.u32 %v1075, %v1139
      %v1204 = vxor.u32 %v1076, %v1140
      %v1205 = vxor.u32 %v1077, %v1141
      %v1206 = vxor.u32 %v1078, %v1142
      %v1207 = vxor.u32 %v1079, %v1143
      %v1208 = vxor.u32 %v1080, %v1144
      %v1209 = vxor.u32 %v1081, %v1145
      %v1210 = vxor.u32 %v1082, %v1146
      %v1211 = vxor.u32 %v1083, %v1147
      %v1212 = vxor.u32 %v1084, %v1148
      %v1213 = vxor.u32 %v1085, %v1149
      %v1214 = vxor.u32 %v1086, %v1150
      %v1215 = vxor.u32 %v1087, %v1151
      %v1216 = vxor.u32 %v1088, %v1152
      %v1217 = vxor.u32 %v1089, %v1153
      %v1218 = vxor.u32 %v1090, %v1154
      %v1219 = vxor.u32 %v1091, %v1155
      %v1220 = vxor.u32 %v1092, %v1156
      %v1221 = vxor.u32 %v1093, %v1157
      %v1222 = vxor.u32 %v1094, %v1158
      %v1223 = vxor.u32 %v1095, %v1159
      %v1224 = vxor.u32 %v1096, %v1160
      %v1225 = vmul.u32 %v1161, 2246822507
      %v1226 = vmul.u32 %v1162, 2246822507
      %v1227 = vmul.u32 %v1163, 2246822507
      %v1228 = vmul.u32 %v1164, 2246822507
      %v1229 = vmul.u32 %v1165, 2246822507
      %v1230 = vmul.u32 %v1166, 2246822507
      %v1231 = vmul.u32 %v1167, 2246822507
      %v1232 = vmul.u32 %v1168, 2246822507
      %v1233 = vmul.u32 %v1169, 2246822507
      %v1234 = vmul.u32 %v1170, 2246822507
      %v1235 = vmul.u32 %v1171, 2246822507
      %v1236 = vmul.u32 %v1172, 2246822507
      %v1237 = vmul.u32 %v1173, 2246822507
      %v1238 = vmul.u32 %v1174, 2246822507
      %v1239 = vmul.u32 %v1175, 2246822507
      %v1240 = vmul.u32 %v1176, 2246822507
      %v1241 = vmul.u32 %v1177, 2246822507
      %v1242 = vmul.u32 %v1178, 2246822507
      %v1243 = vmul.u32 %v1179, 2246822507
      %v1244 = vmul.u32 %v1180, 2246822507
      %v1245 = vmul.u32 %v1181, 2246822507
      %v1246 = vmul.u32 %v1182, 2246822507
      %v1247 = vmul.u32 %v1183, 2246822507
      %v1248 = vmul.u32 %v1184, 2246822507
      %v1249 = vmul.u32 %v1185, 2246822507
      %v1250 = vmul.u32 %v1186, 2246822507
      %v1251 = vmul.u32 %v1187, 2246822507
      %v1252 = vmul.u32 %v1188, 2246822507
      %v1253 = vmul.u32 %v1189, 2246822507
      %v1254 = vmul.u32 %v1190, 2246822507
      %v1255 = vmul.u32 %v1191, 2246822507
      %v1256 = vmul.u32 %v1192, 2246822507
      %v1257 = vmul.u32 %v1193, 2246822507
      %v1258 = vmul.u32 %v1194, 2246822507
      %v1259 = vmul.u32 %v1195, 2246822507
      %v1260 = vmul.u32 %v1196, 2246822507
      %v1261 = vmul.u32 %v1197, 2246822507
      %v1262 = vmul.u32 %v1198, 2246822507
      %v1263 = vmul.u32 %v1199, 2246822507
      %v1264 = vmul.u32 %v1200, 2246822507
      %v1265 = vmul.u32 %v1201, 2246822507
      %v1266 = vmul.u32 %v1202, 2246822507
      %v1267 = vmul.u32 %v1203, 2246822507
      %v1268 = vmul.u32 %v1204, 2246822507
      %v1269 = vmul.u32 %v1205, 2246822507
      %v1270 = vmul.u32 %v1206, 2246822507
      %v1271 = vmul.u32 %v1207, 2246822507
      %v1272 = vmul.u32 %v1208, 2246822507
      %v1273 = vmul.u32 %v1209, 2246822507
      %v1274 = vmul.u32 %v1210, 2246822507
      %v1275 = vmul.u32 %v1211, 2246822507
      %v1276 = vmul.u32 %v1212, 2246822507
      %v1277 = vmul.u32 %v1213, 2246822507
      %v1278 = vmul.u32 %v1214, 2246822507
      %v1279 = vmul.u32 %v1215, 2246822507
      %v1280 = vmul.u32 %v1216, 2246822507
      %v1281 = vmul.u32 %v1217, 2246822507
      %v1282 = vmul.u32 %v1218, 2246822507
      %v1283 = vmul.u32 %v1219, 2246822507
      %v1284 = vmul.u32 %v1220, 2246822507
      %v1285 = vmul.u32 %v1221, 2246822507
      %v1286 = vmul.u32 %v1222, 2246822507
      %v1287 = vmul.u32 %v1223, 2246822507
      %v1288 = vmul.u32 %v1224, 2246822507
      %v1289 = vshrl.u32 %v1225, 13
      %v1290 = vshrl.u32 %v1226, 13
      %v1291 = vshrl.u32 %v1227, 13
      %v1292 = vshrl.u32 %v1228, 13
      %v1293 = vshrl.u32 %v1229, 13
      %v1294 = vshrl.u32 %v1230, 13
      %v1295 = vshrl.u32 %v1231, 13
      %v1296 = vshrl.u32 %v1232, 13
      %v1297 = vshrl.u32 %v1233, 13
      %v1298 = vshrl.u32 %v1234, 13
      %v1299 = vshrl.u32 %v1235, 13
      %v1300 = vshrl.u32 %v1236, 13
      %v1301 = vshrl.u32 %v1237, 13
      %v1302 = vshrl.u32 %v1238, 13
      %v1303 = vshrl.u32 %v1239, 13
      %v1304 = vshrl.u32 %v1240, 13
      %v1305 = vshrl.u32 %v1241, 13
      %v1306 = vshrl.u32 %v1242, 13
      %v1307 = vshrl.u32 %v1243, 13
      %v1308 = vshrl.u32 %v1244, 13
      %v1309 = vshrl.u32 %v1245, 13
      %v1310 = vshrl.u32 %v1246, 13
      %v1311 = vshrl.u32 %v1247, 13
      %v1312 = vshrl.u32 %v1248, 13
      %v1313 = vshrl.u32 %v1249, 13
      %v1314 = vshrl.u32 %v1250, 13
      %v1315 = vshrl.u32 %v1251, 13
      %v1316 = vshrl.u32 %v1252, 13
      %v1317 = vshrl.u32 %v1253, 13
      %v1318 = vshrl.u32 %v1254, 13
      %v1319 = vshrl.u32 %v1255, 13
      %v1320 = vshrl.u32 %v1256, 13
      %v1321 = vshrl.u32 %v1257, 13
      %v1322 = vshrl.u32 %v1258, 13
      %v1323 = vshrl.u32 %v1259, 13
      %v1324 = vshrl.u32 %v1260, 13
      %v1325 = vshrl.u32 %v1261, 13
      %v1326 = vshrl.u32 %v1262, 13
      %v1327 = vshrl.u32 %v1263, 13
      %v1328 = vshrl.u32 %v1264, 13
      %v1329 = vshrl.u32 %v1265, 13
      %v1330 = vshrl.u32 %v1266, 13
      %v1331 = vshrl.u32 %v1267, 13
      %v1332 = vshrl.u32 %v1268, 13
      %v1333 = vshrl.u32 %v1269, 13
      %v1334 = vshrl.u32 %v1270, 13
      %v1335 = vshrl.u32 %v1271, 13
      %v1336 = vshrl.u32 %v1272, 13
      %v1337 = vshrl.u32 %v1273, 13
      %v1338 = vshrl.u32 %v1274, 13
      %v1339 = vshrl.u32 %v1275, 13
      %v1340 = vshrl.u32 %v1276, 13
      %v1341 = vshrl.u32 %v1277, 13
      %v1342 = vshrl.u32 %v1278, 13
      %v1343 = vshrl.u32 %v1279, 13
      %v1344 = vshrl.u32 %v1280, 13
      %v1345 = vshrl.u32 %v1281, 13
      %v1346 = vshrl.u32 %v1282, 13
      %v1347 = vshrl.u32 %v1283, 13
      %v1348 = vshrl.u32 %v1284, 13
      %v1349 = vshrl.u32 %v1285, 13
      %v1350 = vshrl.u32 %v1286, 13
      %v1351 = vshrl.u32 %v1287, 13
      %v1352 = vshrl.u32 %v1288, 13
      %v1353 = vxor.u32 %v1225, %v1289
      %v1354 = vxor.u32 %v1226, %v1290
      %v1355 = vxor.u32 %v1227, %v1291
      %v1356 = vxor.u32 %v1228, %v1292
      %v1357 = vxor.u32 %v1229, %v1293
      %v1358 = vxor.u32 %v1230, %v1294
      %v1359 = vxor.u32 %v1231, %v1295
      %v1360 = vxor.u32 %v1232, %v1296
      %v1361 = vxor.u32 %v1233, %v1297
      %v1362 = vxor.u32 %v1234, %v1298
      %v1363 = vxor.u32 %v1235, %v1299
      %v1364 = vxor.u32 %v1236, %v1300
      %v1365 = vxor.u32 %v1237, %v1301
      %v1366 = vxor.u32 %v1238, %v1302
      %v1367 = vxor.u32 %v1239, %v1303
      %v1368 = vxor.u32 %v1240, %v1304
      %v1369 = vxor.u32 %v1241, %v1305
      %v1370 = vxor.u32 %v1242, %v1306
      %v1371 = vxor.u32 %v1243, %v1307
      %v1372 = vxor.u32 %v1244, %v1308
      %v1373 = vxor.u32 %v1245, %v1309
      %v1374 = vxor.u32 %v1246, %v1310
      %v1375 = vxor.u32 %v1247, %v1311
      %v1376 = vxor.u32 %v1248, %v1312
      %v1377 = vxor.u32 %v1249, %v1313
      %v1378 = vxor.u32 %v1250, %v1314
      %v1379 = vxor.u32 %v1251, %v1315
      %v1380 = vxor.u32 %v1252, %v1316
      %v1381 = vxor.u32 %v1253, %v1317
      %v1382 = vxor.u32 %v1254, %v1318
      %v1383 = vxor.u32 %v1255, %v1319
      %v1384 = vxor.u32 %v1256, %v1320
      %v1385 = vxor.u32 %v1257, %v1321
      %v1386 = vxor.u32 %v1258, %v1322
      %v1387 = vxor.u32 %v1259, %v1323
      %v1388 = vxor.u32 %v1260, %v1324
      %v1389 = vxor.u32 %v1261, %v1325
      %v1390 = vxor.u32 %v1262, %v1326
      %v1391 = vxor.u32 %v1263, %v1327
      %v1392 = vxor.u32 %v1264, %v1328
      %v1393 = vxor.u32 %v1265, %v1329
      %v1394 = vxor.u32 %v1266, %v1330
      %v1395 = vxor.u32 %v1267, %v1331
      %v1396 = vxor.u32 %v1268, %v1332
      %v1397 = vxor.u32 %v1269, %v1333
      %v1398 = vxor.u32 %v1270, %v1334
      %v1399 = vxor.u32 %v1271, %v1335
      %v1400 = vxor.u32 %v1272, %v1336
      %v1401 = vxor.u32 %v1273, %v1337
      %v1402 = vxor.u32 %v1274, %v1338
      %v1403 = vxor.u32 %v1275, %v1339
      %v1404 = vxor.u32 %v1276, %v1340
      %v1405 = vxor.u32 %v1277, %v1341
      %v1406 = vxor.u32 %v1278, %v1342
      %v1407 = vxor.u32 %v1279, %v1343
      %v1408 = vxor.u32 %v1280, %v1344
      %v1409 = vxor.u32 %v1281, %v1345
      %v1410 = vxor.u32 %v1282, %v1346
      %v1411 = vxor.u32 %v1283, %v1347
      %v1412 = vxor.u32 %v1284, %v1348
      %v1413 = vxor.u32 %v1285, %v1349
      %v1414 = vxor.u32 %v1286, %v1350
      %v1415 = vxor.u32 %v1287, %v1351
      %v1416 = vxor.u32 %v1288, %v1352
      %v1417 = vmul.u32 %v1353, 3266489909
      %v1418 = vmul.u32 %v1354, 3266489909
      %v1419 = vmul.u32 %v1355, 3266489909
      %v1420 = vmul.u32 %v1356, 3266489909
      %v1421 = vmul.u32 %v1357, 3266489909
      %v1422 = vmul.u32 %v1358, 3266489909
      %v1423 = vmul.u32 %v1359, 3266489909
      %v1424 = vmul.u32 %v1360, 3266489909
      %v1425 = vmul.u32 %v1361, 3266489909
      %v1426 = vmul.u32 %v1362, 3266489909
      %v1427 = vmul.u32 %v1363, 3266489909
      %v1428 = vmul.u32 %v1364, 3266489909
      %v1429 = vmul.u32 %v1365, 3266489909
      %v1430 = vmul.u32 %v1366, 3266489909
      %v1431 = vmul.u32 %v1367, 3266489909
      %v1432 = vmul.u32 %v1368, 3266489909
      %v1433 = vmul.u32 %v1369, 3266489909
      %v1434 = vmul.u32 %v1370, 3266489909
      %v1435 = vmul.u32 %v1371, 3266489909
      %v1436 = vmul.u32 %v1372, 3266489909
      %v1437 = vmul.u32 %v1373, 3266489909
      %v1438 = vmul.u32 %v1374, 3266489909
      %v1439 = vmul.u32 %v1375, 3266489909
      %v1440 = vmul.u32 %v1376, 3266489909
      %v1441 = vmul.u32 %v1377, 3266489909
      %v1442 = vmul.u32 %v1378, 3266489909
      %v1443 = vmul.u32 %v1379, 3266489909
      %v1444 = vmul.u32 %v1380, 3266489909
      %v1445 = vmul.u32 %v1381, 3266489909
      %v1446 = vmul.u32 %v1382, 3266489909
      %v1447 = vmul.u32 %v1383, 3266489909
      %v1448 = vmul.u32 %v1384, 3266489909
      %v1449 = vmul.u32 %v1385, 3266489909
      %v1450 = vmul.u32 %v1386, 3266489909
      %v1451 = vmul.u32 %v1387, 3266489909
      %v1452 = vmul.u32 %v1388, 3266489909
      %v1453 = vmul.u32 %v1389, 3266489909
      %v1454 = vmul.u32 %v1390, 3266489909
      %v1455 = vmul.u32 %v1391, 3266489909
      %v1456 = vmul.u32 %v1392, 3266489909
      %v1457 = vmul.u32 %v1393, 3266489909
      %v1458 = vmul.u32 %v1394, 3266489909
      %v1459 = vmul.u32 %v1395, 3266489909
      %v1460 = vmul.u32 %v1396, 3266489909
      %v1461 = vmul.u32 %v1397, 3266489909
      %v1462 = vmul.u32 %v1398, 3266489909
      %v1463 = vmul.u32 %v1399, 3266489909
      %v1464 = vmul.u32 %v1400, 3266489909
      %v1465 = vmul.u32 %v1401, 3266489909
      %v1466 = vmul.u32 %v1402, 3266489909
      %v1467 = vmul.u32 %v1403, 3266489909
      %v1468 = vmul.u32 %v1404, 3266489909
      %v1469 = vmul.u32 %v1405, 3266489909
      %v1470 = vmul.u32 %v1406, 3266489909
      %v1471 = vmul.u32 %v1407, 3266489909
      %v1472 = vmul.u32 %v1408, 3266489909
      %v1473 = vmul.u32 %v1409, 3266489909
      %v1474 = vmul.u32 %v1410, 3266489909
      %v1475 = vmul.u32 %v1411, 3266489909
      %v1476 = vmul.u32 %v1412, 3266489909
      %v1477 = vmul.u32 %v1413, 3266489909
      %v1478 = vmul.u32 %v1414, 3266489909
      %v1479 = vmul.u32 %v1415, 3266489909
      %v1480 = vmul.u32 %v1416, 3266489909
      %v1481 = vshrl.u32 %v1417, 16
      %v1482 = vshrl.u32 %v1418, 16
      %v1483 = vshrl.u32 %v1419, 16
      %v1484 = vshrl.u32 %v1420, 16
      %v1485 = vshrl.u32 %v1421, 16
      %v1486 = vshrl.u32 %v1422, 16
      %v1487 = vshrl.u32 %v1423, 16
      %v1488 = vshrl.u32 %v1424, 16
      %v1489 = vshrl.u32 %v1425, 16
      %v1490 = vshrl.u32 %v1426, 16
      %v1491 = vshrl.u32 %v1427, 16
      %v1492 = vshrl.u32 %v1428, 16
      %v1493 = vshrl.u32 %v1429, 16
      %v1494 = vshrl.u32 %v1430, 16
      %v1495 = vshrl.u32 %v1431, 16
      %v1496 = vshrl.u32 %v1432, 16
      %v1497 = vshrl.u32 %v1433, 16
      %v1498 = vshrl.u32 %v1434, 16
      %v1499 = vshrl.u32 %v1435, 16
      %v1500 = vshrl.u32 %v1436, 16
      %v1501 = vshrl.u32 %v1437, 16
      %v1502 = vshrl.u32 %v1438, 16
      %v1503 = vshrl.u32 %v1439, 16
      %v1504 = vshrl.u32 %v1440, 16
      %v1505 = vshrl.u32 %v1441, 16
      %v1506 = vshrl.u32 %v1442, 16
      %v1507 = vshrl.u32 %v1443, 16
      %v1508 = vshrl.u32 %v1444, 16
      %v1509 = vshrl.u32 %v1445, 16
      %v1510 = vshrl.u32 %v1446, 16
      %v1511 = vshrl.u32 %v1447, 16
      %v1512 = vshrl.u32 %v1448, 16
      %v1513 = vshrl.u32 %v1449, 16
      %v1514 = vshrl.u32 %v1450, 16
      %v1515 = vshrl.u32 %v1451, 16
      %v1516 = vshrl.u32 %v1452, 16
      %v1517 = vshrl.u32 %v1453, 16
      %v1518 = vshrl.u32 %v1454, 16
      %v1519 = vshrl.u32 %v1455, 16
      %v1520 = vshrl.u32 %v1456, 16
      %v1521 = vshrl.u32 %v1457, 16
      %v1522 = vshrl.u32 %v1458, 16
      %v1523 = vshrl.u32 %v1459, 16
      %v1524 = vshrl.u32 %v1460, 16
      %v1525 = vshrl.u32 %v1461, 16
      %v1526 = vshrl.u32 %v1462, 16
      %v1527 = vshrl.u32 %v1463, 16
      %v1528 = vshrl.u32 %v1464, 16
      %v1529 = vshrl.u32 %v1465, 16
      %v1530 = vshrl.u32 %v1466, 16
      %v1531 = vshrl.u32 %v1467, 16
      %v1532 = vshrl.u32 %v1468, 16
      %v1533 = vshrl.u32 %v1469, 16
      %v1534 = vshrl.u32 %v1470, 16
      %v1535 = vshrl.u32 %v1471, 16
      %v1536 = vshrl.u32 %v1472, 16
      %v1537 = vshrl.u32 %v1473, 16
      %v1538 = vshrl.u32 %v1474, 16
      %v1539 = vshrl.u32 %v1475, 16
      %v1540 = vshrl.u32 %v1476, 16
      %v1541 = vshrl.u32 %v1477, 16
      %v1542 = vshrl.u32 %v1478, 16
      %v1543 = vshrl.u32 %v1479, 16
      %v1544 = vshrl.u32 %v1480, 16
      %v1545 = vxor.u32 %v1417, %v1481
      %v1546 = vxor.u32 %v1418, %v1482
      %v1547 = vxor.u32 %v1419, %v1483
      %v1548 = vxor.u32 %v1420, %v1484
      %v1549 = vxor.u32 %v1421, %v1485
      %v1550 = vxor.u32 %v1422, %v1486
      %v1551 = vxor.u32 %v1423, %v1487
      %v1552 = vxor.u32 %v1424, %v1488
      %v1553 = vxor.u32 %v1425, %v1489
      %v1554 = vxor.u32 %v1426, %v1490
      %v1555 = vxor.u32 %v1427, %v1491
      %v1556 = vxor.u32 %v1428, %v1492
      %v1557 = vxor.u32 %v1429, %v1493
      %v1558 = vxor.u32 %v1430, %v1494
      %v1559 = vxor.u32 %v1431, %v1495
      %v1560 = vxor.u32 %v1432, %v1496
      %v1561 = vxor.u32 %v1433, %v1497
      %v1562 = vxor.u32 %v1434, %v1498
      %v1563 = vxor.u32 %v1435, %v1499
      %v1564 = vxor.u32 %v1436, %v1500
      %v1565 = vxor.u32 %v1437, %v1501
      %v1566 = vxor.u32 %v1438, %v1502
      %v1567 = vxor.u32 %v1439, %v1503
      %v1568 = vxor.u32 %v1440, %v1504
      %v1569 = vxor.u32 %v1441, %v1505
      %v1570 = vxor.u32 %v1442, %v1506
      %v1571 = vxor.u32 %v1443, %v1507
      %v1572 = vxor.u32 %v1444, %v1508
      %v1573 = vxor.u32 %v1445, %v1509
      %v1574 = vxor.u32 %v1446, %v1510
      %v1575 = vxor.u32 %v1447, %v1511
      %v1576 = vxor.u32 %v1448, %v1512
      %v1577 = vxor.u32 %v1449, %v1513
      %v1578 = vxor.u32 %v1450, %v1514
      %v1579 = vxor.u32 %v1451, %v1515
      %v1580 = vxor.u32 %v1452, %v1516
      %v1581 = vxor.u32 %v1453, %v1517
      %v1582 = vxor.u32 %v1454, %v1518
      %v1583 = vxor.u32 %v1455, %v1519
      %v1584 = vxor.u32 %v1456, %v1520
      %v1585 = vxor.u32 %v1457, %v1521
      %v1586 = vxor.u32 %v1458, %v1522
      %v1587 = vxor.u32 %v1459, %v1523
      %v1588 = vxor.u32 %v1460, %v1524
      %v1589 = vxor.u32 %v1461, %v1525
      %v1590 = vxor.u32 %v1462, %v1526
      %v1591 = vxor.u32 %v1463, %v1527
      %v1592 = vxor.u32 %v1464, %v1528
      %v1593 = vxor.u32 %v1465, %v1529
      %v1594 = vxor.u32 %v1466, %v1530
      %v1595 = vxor.u32 %v1467, %v1531
      %v1596 = vxor.u32 %v1468, %v1532
      %v1597 = vxor.u32 %v1469, %v1533
      %v1598 = vxor.u32 %v1470, %v1534
      %v1599 = vxor.u32 %v1471, %v1535
      %v1600 = vxor.u32 %v1472, %v1536
      %v1601 = vxor.u32 %v1473, %v1537
      %v1602 = vxor.u32 %v1474, %v1538
      %v1603 = vxor.u32 %v1475, %v1539
      %v1604 = vxor.u32 %v1476, %v1540
      %v1605 = vxor.u32 %v1477, %v1541
      %v1606 = vxor.u32 %v1478, %v1542
      %v1607 = vxor.u32 %v1479, %v1543
      %v1608 = vxor.u32 %v1480, %v1544
      %vm1609 = vcmp.lt.u32.totalorder %v1545, 3865470566
      %vm1610 = vcmp.lt.u32.totalorder %v1546, 3865470566
      %vm1611 = vcmp.lt.u32.totalorder %v1547, 3865470566
      %vm1612 = vcmp.lt.u32.totalorder %v1548, 3865470566
      %vm1613 = vcmp.lt.u32.totalorder %v1549, 3865470566
      %vm1614 = vcmp.lt.u32.totalorder %v1550, 3865470566
      %vm1615 = vcmp.lt.u32.totalorder %v1551, 3865470566
      %vm1616 = vcmp.lt.u32.totalorder %v1552, 3865470566
      %vm1617 = vcmp.lt.u32.totalorder %v1553, 3865470566
      %vm1618 = vcmp.lt.u32.totalorder %v1554, 3865470566
      %vm1619 = vcmp.lt.u32.totalorder %v1555, 3865470566
      %vm1620 = vcmp.lt.u32.totalorder %v1556, 3865470566
      %vm1621 = vcmp.lt.u32.totalorder %v1557, 3865470566
      %vm1622 = vcmp.lt.u32.totalorder %v1558, 3865470566
      %vm1623 = vcmp.lt.u32.totalorder %v1559, 3865470566
      %vm1624 = vcmp.lt.u32.totalorder %v1560, 3865470566
      %vm1625 = vcmp.lt.u32.totalorder %v1561, 3865470566
      %vm1626 = vcmp.lt.u32.totalorder %v1562, 3865470566
      %vm1627 = vcmp.lt.u32.totalorder %v1563, 3865470566
      %vm1628 = vcmp.lt.u32.totalorder %v1564, 3865470566
      %vm1629 = vcmp.lt.u32.totalorder %v1565, 3865470566
      %vm1630 = vcmp.lt.u32.totalorder %v1566, 3865470566
      %vm1631 = vcmp.lt.u32.totalorder %v1567, 3865470566
      %vm1632 = vcmp.lt.u32.totalorder %v1568, 3865470566
      %vm1633 = vcmp.lt.u32.totalorder %v1569, 3865470566
      %vm1634 = vcmp.lt.u32.totalorder %v1570, 3865470566
      %vm1635 = vcmp.lt.u32.totalorder %v1571, 3865470566
      %vm1636 = vcmp.lt.u32.totalorder %v1572, 3865470566
      %vm1637 = vcmp.lt.u32.totalorder %v1573, 3865470566
      %vm1638 = vcmp.lt.u32.totalorder %v1574, 3865470566
      %vm1639 = vcmp.lt.u32.totalorder %v1575, 3865470566
      %vm1640 = vcmp.lt.u32.totalorder %v1576, 3865470566
      %vm1641 = vcmp.lt.u32.totalorder %v1577, 3865470566
      %vm1642 = vcmp.lt.u32.totalorder %v1578, 3865470566
      %vm1643 = vcmp.lt.u32.totalorder %v1579, 3865470566
      %vm1644 = vcmp.lt.u32.totalorder %v1580, 3865470566
      %vm1645 = vcmp.lt.u32.totalorder %v1581, 3865470566
      %vm1646 = vcmp.lt.u32.totalorder %v1582, 3865470566
      %vm1647 = vcmp.lt.u32.totalorder %v1583, 3865470566
      %vm1648 = vcmp.lt.u32.totalorder %v1584, 3865470566
      %vm1649 = vcmp.lt.u32.totalorder %v1585, 3865470566
      %vm1650 = vcmp.lt.u32.totalorder %v1586, 3865470566
      %vm1651 = vcmp.lt.u32.totalorder %v1587, 3865470566
      %vm1652 = vcmp.lt.u32.totalorder %v1588, 3865470566
      %vm1653 = vcmp.lt.u32.totalorder %v1589, 3865470566
      %vm1654 = vcmp.lt.u32.totalorder %v1590, 3865470566
      %vm1655 = vcmp.lt.u32.totalorder %v1591, 3865470566
      %vm1656 = vcmp.lt.u32.totalorder %v1592, 3865470566
      %vm1657 = vcmp.lt.u32.totalorder %v1593, 3865470566
      %vm1658 = vcmp.lt.u32.totalorder %v1594, 3865470566
      %vm1659 = vcmp.lt.u32.totalorder %v1595, 3865470566
      %vm1660 = vcmp.lt.u32.totalorder %v1596, 3865470566
      %vm1661 = vcmp.lt.u32.totalorder %v1597, 3865470566
      %vm1662 = vcmp.lt.u32.totalorder %v1598, 3865470566
      %vm1663 = vcmp.lt.u32.totalorder %v1599, 3865470566
      %vm1664 = vcmp.lt.u32.totalorder %v1600, 3865470566
      %vm1665 = vcmp.lt.u32.totalorder %v1601, 3865470566
      %vm1666 = vcmp.lt.u32.totalorder %v1602, 3865470566
      %vm1667 = vcmp.lt.u32.totalorder %v1603, 3865470566
      %vm1668 = vcmp.lt.u32.totalorder %v1604, 3865470566
      %vm1669 = vcmp.lt.u32.totalorder %v1605, 3865470566
      %vm1670 = vcmp.lt.u32.totalorder %v1606, 3865470566
      %vm1671 = vcmp.lt.u32.totalorder %v1607, 3865470566
      %vm1672 = vcmp.lt.u32.totalorder %v1608, 3865470566
      %v1673 = vsel %vm1609, %v846, 0.0
      %v1674 = vsel %vm1610, %v847, 0.0
      %v1675 = vsel %vm1611, %v848, 0.0
      %v1676 = vsel %vm1612, %v849, 0.0
      %v1677 = vsel %vm1613, %v850, 0.0
      %v1678 = vsel %vm1614, %v851, 0.0
      %v1679 = vsel %vm1615, %v852, 0.0
      %v1680 = vsel %vm1616, %v853, 0.0
      %v1681 = vsel %vm1617, %v854, 0.0
      %v1682 = vsel %vm1618, %v855, 0.0
      %v1683 = vsel %vm1619, %v856, 0.0
      %v1684 = vsel %vm1620, %v857, 0.0
      %v1685 = vsel %vm1621, %v858, 0.0
      %v1686 = vsel %vm1622, %v859, 0.0
      %v1687 = vsel %vm1623, %v860, 0.0
      %v1688 = vsel %vm1624, %v861, 0.0
      %v1689 = vsel %vm1625, %v862, 0.0
      %v1690 = vsel %vm1626, %v863, 0.0
      %v1691 = vsel %vm1627, %v864, 0.0
      %v1692 = vsel %vm1628, %v865, 0.0
      %v1693 = vsel %vm1629, %v866, 0.0
      %v1694 = vsel %vm1630, %v867, 0.0
      %v1695 = vsel %vm1631, %v868, 0.0
      %v1696 = vsel %vm1632, %v869, 0.0
      %v1697 = vsel %vm1633, %v870, 0.0
      %v1698 = vsel %vm1634, %v871, 0.0
      %v1699 = vsel %vm1635, %v872, 0.0
      %v1700 = vsel %vm1636, %v873, 0.0
      %v1701 = vsel %vm1637, %v874, 0.0
      %v1702 = vsel %vm1638, %v875, 0.0
      %v1703 = vsel %vm1639, %v876, 0.0
      %v1704 = vsel %vm1640, %v877, 0.0
      %v1705 = vsel %vm1641, %v878, 0.0
      %v1706 = vsel %vm1642, %v879, 0.0
      %v1707 = vsel %vm1643, %v880, 0.0
      %v1708 = vsel %vm1644, %v881, 0.0
      %v1709 = vsel %vm1645, %v882, 0.0
      %v1710 = vsel %vm1646, %v883, 0.0
      %v1711 = vsel %vm1647, %v884, 0.0
      %v1712 = vsel %vm1648, %v885, 0.0
      %v1713 = vsel %vm1649, %v886, 0.0
      %v1714 = vsel %vm1650, %v887, 0.0
      %v1715 = vsel %vm1651, %v888, 0.0
      %v1716 = vsel %vm1652, %v889, 0.0
      %v1717 = vsel %vm1653, %v890, 0.0
      %v1718 = vsel %vm1654, %v891, 0.0
      %v1719 = vsel %vm1655, %v892, 0.0
      %v1720 = vsel %vm1656, %v893, 0.0
      %v1721 = vsel %vm1657, %v894, 0.0
      %v1722 = vsel %vm1658, %v895, 0.0
      %v1723 = vsel %vm1659, %v896, 0.0
      %v1724 = vsel %vm1660, %v897, 0.0
      %v1725 = vsel %vm1661, %v898, 0.0
      %v1726 = vsel %vm1662, %v899, 0.0
      %v1727 = vsel %vm1663, %v900, 0.0
      %v1728 = vsel %vm1664, %v901, 0.0
      %v1729 = vsel %vm1665, %v902, 0.0
      %v1730 = vsel %vm1666, %v903, 0.0
      %v1731 = vsel %vm1667, %v904, 0.0
      %v1732 = vsel %vm1668, %v905, 0.0
      %v1733 = vsel %vm1669, %v906, 0.0
      %v1734 = vsel %vm1670, %v907, 0.0
      %v1735 = vsel %vm1671, %v908, 0.0
      %v1736 = vsel %vm1672, %v909, 0.0
      %v1737 = vpack.c.bf16 %v1677, %v1673
      %v1738 = vpack.c.bf16 %v1678, %v1674
      %v1739 = vpack.c.bf16 %v1679, %v1675
      %v1740 = vpack.c.bf16 %v1680, %v1676
      %v1741 = vpack.c.bf16 %v1685, %v1681
      %v1742 = vpack.c.bf16 %v1686, %v1682
      %v1743 = vpack.c.bf16 %v1687, %v1683
      %v1744 = vpack.c.bf16 %v1688, %v1684
      %v1745 = vpack.c.bf16 %v1693, %v1689
      %v1746 = vpack.c.bf16 %v1694, %v1690
      %v1747 = vpack.c.bf16 %v1695, %v1691
      %v1748 = vpack.c.bf16 %v1696, %v1692
      %v1749 = vpack.c.bf16 %v1701, %v1697
      %v1750 = vpack.c.bf16 %v1702, %v1698
      %v1751 = vpack.c.bf16 %v1703, %v1699
      %v1752 = vpack.c.bf16 %v1704, %v1700
      %v1753 = vpack.c.bf16 %v1709, %v1705
      %v1754 = vpack.c.bf16 %v1710, %v1706
      %v1755 = vpack.c.bf16 %v1711, %v1707
      %v1756 = vpack.c.bf16 %v1712, %v1708
      %v1757 = vpack.c.bf16 %v1717, %v1713
      %v1758 = vpack.c.bf16 %v1718, %v1714
      %v1759 = vpack.c.bf16 %v1719, %v1715
      %v1760 = vpack.c.bf16 %v1720, %v1716
      %v1761 = vpack.c.bf16 %v1725, %v1721
      %v1762 = vpack.c.bf16 %v1726, %v1722
      %v1763 = vpack.c.bf16 %v1727, %v1723
      %v1764 = vpack.c.bf16 %v1728, %v1724
      %v1765 = vpack.c.bf16 %v1733, %v1729
      %v1766 = vpack.c.bf16 %v1734, %v1730
      %v1767 = vpack.c.bf16 %v1735, %v1731
      %v1768 = vpack.c.bf16 %v1736, %v1732
      %v1769 = vld [vmem:[#allocation10] sm:$0xf]
      %v1770 = vld [vmem:[#allocation10 + $0x4] sm:$0xf]
      %v1771 = vld [vmem:[#allocation10 + $0x8] sm:$0xf]
      %v1772 = vld [vmem:[#allocation10 + $0xc] sm:$0xf]
      %v1773 = vld [vmem:[#allocation10 + $0x10] sm:$0xf]
      %v1774 = vld [vmem:[#allocation10 + $0x14] sm:$0xf]
      %v1775 = vld [vmem:[#allocation10 + $0x18] sm:$0xf]
      %v1776 = vld [vmem:[#allocation10 + $0x1c] sm:$0xf]
      %v1777 = vld [vmem:[#allocation10 + $0x20] sm:$0xf]
      %v1778 = vld [vmem:[#allocation10 + $0x24] sm:$0xf]
      %v1779 = vld [vmem:[#allocation10 + $0x28] sm:$0xf]
      %v1780 = vld [vmem:[#allocation10 + $0x2c] sm:$0xf]
      %v1781 = vld [vmem:[#allocation10 + $0x30] sm:$0xf]
      %v1782 = vld [vmem:[#allocation10 + $0x34] sm:$0xf]
      %v1783 = vld [vmem:[#allocation10 + $0x38] sm:$0xf]
      %v1784 = vld [vmem:[#allocation10 + $0x3c] sm:$0xf]
      %v1785 = vld [vmem:[#allocation10 + $0x40] sm:$0xf]
      %v1786 = vld [vmem:[#allocation10 + $0x44] sm:$0xf]
      %v1787 = vld [vmem:[#allocation10 + $0x48] sm:$0xf]
      %v1788 = vld [vmem:[#allocation10 + $0x4c] sm:$0xf]
      %v1789 = vld [vmem:[#allocation10 + $0x50] sm:$0xf]
      %v1790 = vld [vmem:[#allocation10 + $0x54] sm:$0xf]
      %v1791 = vld [vmem:[#allocation10 + $0x58] sm:$0xf]
      %v1792 = vld [vmem:[#allocation10 + $0x5c] sm:$0xf]
      %v1793 = vld [vmem:[#allocation10 + $0x60] sm:$0xf]
      %v1794 = vld [vmem:[#allocation10 + $0x64] sm:$0xf]
      %v1795 = vld [vmem:[#allocation10 + $0x68] sm:$0xf]
      %v1796 = vld [vmem:[#allocation10 + $0x6c] sm:$0xf]
      %v1797 = vld [vmem:[#allocation10 + $0x70] sm:$0xf]
      %v1798 = vld [vmem:[#allocation10 + $0x74] sm:$0xf]
      %v1799 = vld [vmem:[#allocation10 + $0x78] sm:$0xf]
      %v1800 = vld [vmem:[#allocation10 + $0x7c] sm:$0xf]
      %v1801 = vld [vmem:[#allocation10 + $0x80] sm:$0xf]
      %v1802 = vld [vmem:[#allocation10 + $0x84] sm:$0xf]
      %v1803 = vld [vmem:[#allocation10 + $0x88] sm:$0xf]
      %v1804 = vld [vmem:[#allocation10 + $0x8c] sm:$0xf]
      %v1805 = vld [vmem:[#allocation10 + $0x90] sm:$0xf]
      %v1806 = vld [vmem:[#allocation10 + $0x94] sm:$0xf]
      %v1807 = vld [vmem:[#allocation10 + $0x98] sm:$0xf]
      %v1808 = vld [vmem:[#allocation10 + $0x9c] sm:$0xf]
      %v1809 = vld [vmem:[#allocation10 + $0xa0] sm:$0xf]
      %v1810 = vld [vmem:[#allocation10 + $0xa4] sm:$0xf]
      %v1811 = vld [vmem:[#allocation10 + $0xa8] sm:$0xf]
      %v1812 = vld [vmem:[#allocation10 + $0xac] sm:$0xf]
      %v1813 = vld [vmem:[#allocation10 + $0xb0] sm:$0xf]
      %v1814 = vld [vmem:[#allocation10 + $0xb4] sm:$0xf]
      %v1815 = vld [vmem:[#allocation10 + $0xb8] sm:$0xf]
      %v1816 = vld [vmem:[#allocation10 + $0xbc] sm:$0xf]
      %v1817 = vld [vmem:[#allocation10 + $0xc0] sm:$0xf]
      %v1818 = vld [vmem:[#allocation10 + $0xc4] sm:$0xf]
      %v1819 = vld [vmem:[#allocation10 + $0xc8] sm:$0xf]
      %v1820 = vld [vmem:[#allocation10 + $0xcc] sm:$0xf]
      %v1821 = vld [vmem:[#allocation10 + $0xd0] sm:$0xf]
      %v1822 = vld [vmem:[#allocation10 + $0xd4] sm:$0xf]
      %v1823 = vld [vmem:[#allocation10 + $0xd8] sm:$0xf]
      %v1824 = vld [vmem:[#allocation10 + $0xdc] sm:$0xf]
      %v1825 = vld [vmem:[#allocation10 + $0xe0] sm:$0xf]
      %v1826 = vld [vmem:[#allocation10 + $0xe4] sm:$0xf]
      %v1827 = vld [vmem:[#allocation10 + $0xe8] sm:$0xf]
      %v1828 = vld [vmem:[#allocation10 + $0xec] sm:$0xf]
      %v1829 = vld [vmem:[#allocation10 + $0xf0] sm:$0xf]
      %v1830 = vld [vmem:[#allocation10 + $0xf4] sm:$0xf]
      %v1831 = vld [vmem:[#allocation10 + $0xf8] sm:$0xf]
      %v1832 = vld [vmem:[#allocation10 + $0xfc] sm:$0xf]
      %v1897 = vunpack.c.l.b16 %v1769
      %v1898 = vunpack.c.l.b16 %v1770
      %v1899 = vunpack.c.l.b16 %v1771
      %v1900 = vunpack.c.l.b16 %v1772
      %v1901 = vunpack.c.l.b16 %v1773
      %v1902 = vunpack.c.l.b16 %v1774
      %v1903 = vunpack.c.l.b16 %v1775
      %v1904 = vunpack.c.l.b16 %v1776
      %v1905 = vunpack.c.l.b16 %v1777
      %v1906 = vunpack.c.l.b16 %v1778
      %v1907 = vunpack.c.l.b16 %v1779
      %v1908 = vunpack.c.l.b16 %v1780
      %v1909 = vunpack.c.l.b16 %v1781
      %v1910 = vunpack.c.l.b16 %v1782
      %v1911 = vunpack.c.l.b16 %v1783
      %v1912 = vunpack.c.l.b16 %v1784
      %v1913 = vunpack.c.l.b16 %v1785
      %v1914 = vunpack.c.l.b16 %v1786
      %v1915 = vunpack.c.l.b16 %v1787
      %v1916 = vunpack.c.l.b16 %v1788
      %v1917 = vunpack.c.l.b16 %v1789
      %v1918 = vunpack.c.l.b16 %v1790
      %v1919 = vunpack.c.l.b16 %v1791
      %v1920 = vunpack.c.l.b16 %v1792
      %v1921 = vunpack.c.l.b16 %v1793
      %v1922 = vunpack.c.l.b16 %v1794
      %v1923 = vunpack.c.l.b16 %v1795
      %v1924 = vunpack.c.l.b16 %v1796
      %v1925 = vunpack.c.l.b16 %v1797
      %v1926 = vunpack.c.l.b16 %v1798
      %v1927 = vunpack.c.l.b16 %v1799
      %v1928 = vunpack.c.l.b16 %v1800
      %v1929 = vunpack.c.l.b16 %v1801
      %v1930 = vunpack.c.l.b16 %v1802
      %v1931 = vunpack.c.l.b16 %v1803
      %v1932 = vunpack.c.l.b16 %v1804
      %v1933 = vunpack.c.l.b16 %v1805
      %v1934 = vunpack.c.l.b16 %v1806
      %v1935 = vunpack.c.l.b16 %v1807
      %v1936 = vunpack.c.l.b16 %v1808
      %v1937 = vunpack.c.l.b16 %v1809
      %v1938 = vunpack.c.l.b16 %v1810
      %v1939 = vunpack.c.l.b16 %v1811
      %v1940 = vunpack.c.l.b16 %v1812
      %v1941 = vunpack.c.l.b16 %v1813
      %v1942 = vunpack.c.l.b16 %v1814
      %v1943 = vunpack.c.l.b16 %v1815
      %v1944 = vunpack.c.l.b16 %v1816
      %v1945 = vunpack.c.l.b16 %v1817
      %v1946 = vunpack.c.l.b16 %v1818
      %v1947 = vunpack.c.l.b16 %v1819
      %v1948 = vunpack.c.l.b16 %v1820
      %v1949 = vunpack.c.l.b16 %v1821
      %v1950 = vunpack.c.l.b16 %v1822
      %v1951 = vunpack.c.l.b16 %v1823
      %v1952 = vunpack.c.l.b16 %v1824
      %v1953 = vunpack.c.l.b16 %v1825
      %v1954 = vunpack.c.l.b16 %v1826
      %v1955 = vunpack.c.l.b16 %v1827
      %v1956 = vunpack.c.l.b16 %v1828
      %v1957 = vunpack.c.l.b16 %v1829
      %v1958 = vunpack.c.l.b16 %v1830
      %v1959 = vunpack.c.l.b16 %v1831
      %v1960 = vunpack.c.l.b16 %v1832
      %v1961 = vpack.c.b16 %v1898, %v1897
      %v1962 = vpack.c.b16 %v1900, %v1899
      %v1963 = vpack.c.b16 %v1902, %v1901
      %v1964 = vpack.c.b16 %v1904, %v1903
      %v1965 = vpack.c.b16 %v1906, %v1905
      %v1966 = vpack.c.b16 %v1908, %v1907
      %v1967 = vpack.c.b16 %v1910, %v1909
      %v1968 = vpack.c.b16 %v1912, %v1911
      %v1969 = vpack.c.b16 %v1914, %v1913
      %v1970 = vpack.c.b16 %v1916, %v1915
      %v1971 = vpack.c.b16 %v1918, %v1917
      %v1972 = vpack.c.b16 %v1920, %v1919
      %v1973 = vpack.c.b16 %v1922, %v1921
      %v1974 = vpack.c.b16 %v1924, %v1923
      %v1975 = vpack.c.b16 %v1926, %v1925
      %v1976 = vpack.c.b16 %v1928, %v1927
      %v1977 = vpack.c.b16 %v1930, %v1929
      %v1978 = vpack.c.b16 %v1932, %v1931
      %v1979 = vpack.c.b16 %v1934, %v1933
      %v1980 = vpack.c.b16 %v1936, %v1935
      %v1981 = vpack.c.b16 %v1938, %v1937
      %v1982 = vpack.c.b16 %v1940, %v1939
      %v1983 = vpack.c.b16 %v1942, %v1941
      %v1984 = vpack.c.b16 %v1944, %v1943
      %v1985 = vpack.c.b16 %v1946, %v1945
      %v1986 = vpack.c.b16 %v1948, %v1947
      %v1987 = vpack.c.b16 %v1950, %v1949
      %v1988 = vpack.c.b16 %v1952, %v1951
      %v1989 = vpack.c.b16 %v1954, %v1953
      %v1990 = vpack.c.b16 %v1956, %v1955
      %v1991 = vpack.c.b16 %v1958, %v1957
      %v1992 = vpack.c.b16 %v1960, %v1959
      %2025 = vmatprep.subr.bf16.mxu0 0
      %2026 = vmatpush1.bf16.msra.mxu0 %v1961
      %2027 = vmatprep.subr.bf16.mxu0 0
      %2028 = vmatpush1.bf16.msra.mxu0 %v1962
      %2029 = vmatprep.subr.bf16.mxu0 0
      %2030 = vmatpush1.bf16.msra.mxu0 %v1963
      %2031 = vmatprep.subr.bf16.mxu0 0
      %2032 = vmatpush1.bf16.msra.mxu0 %v1964
      %2033 = vmatprep.subr.bf16.mxu0 0
      %2034 = vmatpush1.bf16.msra.mxu0 %v1965
      %2035 = vmatprep.subr.bf16.mxu0 0
      %2036 = vmatpush1.bf16.msra.mxu0 %v1966
      %2037 = vmatprep.subr.bf16.mxu0 0
      %2038 = vmatpush1.bf16.msra.mxu0 %v1967
      %2039 = vmatprep.subr.bf16.mxu0 0
      %2040 = vmatpush1.bf16.msra.mxu0 %v1968
      %2041 = vmatprep.subr.bf16.mxu0 0
      %2042 = vmatpush1.bf16.msra.mxu0 %v1969
      %2043 = vmatprep.subr.bf16.mxu0 0
      %2044 = vmatpush1.bf16.msra.mxu0 %v1970
      %2045 = vmatprep.subr.bf16.mxu0 0
      %2046 = vmatpush1.bf16.msra.mxu0 %v1971
      %2047 = vmatprep.subr.bf16.mxu0 0
      %2048 = vmatpush1.bf16.msra.mxu0 %v1972
      %2049 = vmatprep.subr.bf16.mxu0 0
      %2050 = vmatpush1.bf16.msra.mxu0 %v1973
      %2051 = vmatprep.subr.bf16.mxu0 0
      %2052 = vmatpush1.bf16.msra.mxu0 %v1974
      %2053 = vmatprep.subr.bf16.mxu0 0
      %2054 = vmatpush1.bf16.msra.mxu0 %v1975
      %2055 = vmatprep.subr.bf16.mxu0 0
      %2056 = vmatpush1.bf16.msra.mxu0 %v1976
      %2057 = vmatprep.mubr.bf16.mxu0 %v1738
      %2058 = vmatmul.mubr.bf16.gmra.mrb[0].mxu0 %v1737
      %v2059 = vpop.f32.mrb[0].mxu0
      %v2060 = vadd.f32 0.0, %v2059
      %v2061 = vpop.f32.mrb[0].mxu0
      %v2062 = vpop.f32.mrb[0].mxu0
      %v2063 = vadd.f32 0.0, %v2062
      %v2064 = vpop.f32.mrb[0].mxu0
      %2065 = vmatprep.mubr.bf16.mxu0 %v1742
      %2066 = vmatmul.mubr.bf16.gmra.mrb[0].mxu0 %v1741
      %v2067 = vpop.f32.mrb[0].mxu0
      %v2068 = vadd.f32 0.0, %v2067
      %v2069 = vpop.f32.mrb[0].mxu0
      %v2070 = vpop.f32.mrb[0].mxu0
      %v2071 = vadd.f32 0.0, %v2070
      %v2072 = vpop.f32.mrb[0].mxu0
      %2073 = vmatprep.mubr.bf16.mxu0 %v1746
      %2074 = vmatmul.mubr.bf16.gmra.mrb[0].mxu0 %v1745
      %v2075 = vpop.f32.mrb[0].mxu0
      %v2076 = vadd.f32 0.0, %v2075
      %v2077 = vpop.f32.mrb[0].mxu0
      %v2078 = vpop.f32.mrb[0].mxu0
      %v2079 = vadd.f32 0.0, %v2078
      %v2080 = vpop.f32.mrb[0].mxu0
      %2081 = vmatprep.mubr.bf16.mxu0 %v1750
      %2082 = vmatmul.mubr.bf16.gmra.mrb[0].mxu0 %v1749
      %v2083 = vpop.f32.mrb[0].mxu0
      %v2084 = vadd.f32 0.0, %v2083
      %v2085 = vpop.f32.mrb[0].mxu0
      %v2086 = vpop.f32.mrb[0].mxu0
      %v2087 = vadd.f32 0.0, %v2086
      %v2088 = vpop.f32.mrb[0].mxu0
      %2089 = vmatprep.mubr.bf16.mxu0 %v1754
      %2090 = vmatmul.mubr.bf16.gmra.mrb[0].mxu0 %v1753
      %v2091 = vpop.f32.mrb[0].mxu0
      %v2092 = vadd.f32 0.0, %v2091
      %v2093 = vpop.f32.mrb[0].mxu0
      %v2094 = vpop.f32.mrb[0].mxu0
      %v2095 = vadd.f32 0.0, %v2094
      %v2096 = vpop.f32.mrb[0].mxu0
      %2097 = vmatprep.mubr.bf16.mxu0 %v1758
      %2098 = vmatmul.mubr.bf16.gmra.mrb[0].mxu0 %v1757
      %v2099 = vpop.f32.mrb[0].mxu0
      %v2100 = vadd.f32 0.0, %v2099
      %v2101 = vpop.f32.mrb[0].mxu0
      %v2102 = vpop.f32.mrb[0].mxu0
      %v2103 = vadd.f32 0.0, %v2102
      %v2104 = vpop.f32.mrb[0].mxu0
      %2105 = vmatprep.mubr.bf16.mxu0 %v1762
      %2106 = vmatmul.mubr.bf16.gmra.mrb[0].mxu0 %v1761
      %v2107 = vpop.f32.mrb[0].mxu0
      %v2108 = vadd.f32 0.0, %v2107
      %v2109 = vpop.f32.mrb[0].mxu0
      %v2110 = vpop.f32.mrb[0].mxu0
      %v2111 = vadd.f32 0.0, %v2110
      %v2112 = vpop.f32.mrb[0].mxu0
      %2113 = vmatprep.mubr.bf16.mxu0 %v1766
      %2114 = vmatmul.mubr.bf16.gmra.mrb[0].mxu0 %v1765
      %v2115 = vpop.f32.mrb[0].mxu0
      %v2116 = vadd.f32 0.0, %v2115
      %v2117 = vpop.f32.mrb[0].mxu0
      %v2118 = vpop.f32.mrb[0].mxu0
      %v2119 = vadd.f32 0.0, %v2118
      %v2120 = vpop.f32.mrb[0].mxu0
      %2121 = vdwg.mxu0
      %2122 = vmatprep.subr.bf16.mxu0 0
      %2123 = vmatpush1.bf16.msra.mxu0 %v1977
      %2124 = vmatprep.subr.bf16.mxu0 0
      %2125 = vmatpush1.bf16.msra.mxu0 %v1978
      %2126 = vmatprep.subr.bf16.mxu0 0
      %2127 = vmatpush1.bf16.msra.mxu0 %v1979
      %2128 = vmatprep.subr.bf16.mxu0 0
      %2129 = vmatpush1.bf16.msra.mxu0 %v1980
      %2130 = vmatprep.subr.bf16.mxu0 0
      %2131 = vmatpush1.bf16.msra.mxu0 %v1981
      %2132 = vmatprep.subr.bf16.mxu0 0
      %2133 = vmatpush1.bf16.msra.mxu0 %v1982
      %2134 = vmatprep.subr.bf16.mxu0 0
      %2135 = vmatpush1.bf16.msra.mxu0 %v1983
      %2136 = vmatprep.subr.bf16.mxu0 0
      %2137 = vmatpush1.bf16.msra.mxu0 %v1984
      %2138 = vmatprep.subr.bf16.mxu0 0
      %2139 = vmatpush1.bf16.msra.mxu0 %v1985
      %2140 = vmatprep.subr.bf16.mxu0 0
      %2141 = vmatpush1.bf16.msra.mxu0 %v1986
      %2142 = vmatprep.subr.bf16.mxu0 0
      %2143 = vmatpush1.bf16.msra.mxu0 %v1987
      %2144 = vmatprep.subr.bf16.mxu0 0
      %2145 = vmatpush1.bf16.msra.mxu0 %v1988
      %2146 = vmatprep.subr.bf16.mxu0 0
      %2147 = vmatpush1.bf16.msra.mxu0 %v1989
      %2148 = vmatprep.subr.bf16.mxu0 0
      %2149 = vmatpush1.bf16.msra.mxu0 %v1990
      %2150 = vmatprep.subr.bf16.mxu0 0
      %2151 = vmatpush1.bf16.msra.mxu0 %v1991
      %2152 = vmatprep.subr.bf16.mxu0 0
      %2153 = vmatpush1.bf16.msra.mxu0 %v1992
      %2154 = vmatprep.mubr.bf16.mxu0 %v1740
      %2155 = vmatmul.mubr.bf16.gmra.mrb[0].mxu0 %v1739
      %v2156 = vpop.f32.mrb[0].mxu0
      %v2157 = vadd.f32 %v2060, %v2156
      %v2158 = vpop.f32.mrb[0].mxu0
      %v2159 = vpop.f32.mrb[0].mxu0
      %v2160 = vadd.f32 %v2063, %v2159
      %v2161 = vpop.f32.mrb[0].mxu0
      %2162 = vmatprep.mubr.bf16.mxu0 %v1744
      %2163 = vmatmul.mubr.bf16.gmra.mrb[0].mxu0 %v1743
      %v2164 = vpop.f32.mrb[0].mxu0
      %v2165 = vadd.f32 %v2068, %v2164
      %v2166 = vpop.f32.mrb[0].mxu0
      %v2167 = vpop.f32.mrb[0].mxu0
      %v2168 = vadd.f32 %v2071, %v2167
      %v2169 = vpop.f32.mrb[0].mxu0
      %2170 = vmatprep.mubr.bf16.mxu0 %v1748
      %2171 = vmatmul.mubr.bf16.gmra.mrb[0].mxu0 %v1747
      %v2172 = vpop.f32.mrb[0].mxu0
      %v2173 = vadd.f32 %v2076, %v2172
      %v2174 = vpop.f32.mrb[0].mxu0
      %v2175 = vpop.f32.mrb[0].mxu0
      %v2176 = vadd.f32 %v2079, %v2175
      %v2177 = vpop.f32.mrb[0].mxu0
      %2178 = vmatprep.mubr.bf16.mxu0 %v1752
      %2179 = vmatmul.mubr.bf16.gmra.mrb[0].mxu0 %v1751
      %v2180 = vpop.f32.mrb[0].mxu0
      %v2181 = vadd.f32 %v2084, %v2180
      %v2182 = vpop.f32.mrb[0].mxu0
      %v2183 = vpop.f32.mrb[0].mxu0
      %v2184 = vadd.f32 %v2087, %v2183
      %v2185 = vpop.f32.mrb[0].mxu0
      %2186 = vmatprep.mubr.bf16.mxu0 %v1756
      %2187 = vmatmul.mubr.bf16.gmra.mrb[0].mxu0 %v1755
      %v2188 = vpop.f32.mrb[0].mxu0
      %v2189 = vadd.f32 %v2092, %v2188
      %v2190 = vpop.f32.mrb[0].mxu0
      %v2191 = vpop.f32.mrb[0].mxu0
      %v2192 = vadd.f32 %v2095, %v2191
      %v2193 = vpop.f32.mrb[0].mxu0
      %2194 = vmatprep.mubr.bf16.mxu0 %v1760
      %2195 = vmatmul.mubr.bf16.gmra.mrb[0].mxu0 %v1759
      %v2196 = vpop.f32.mrb[0].mxu0
      %v2197 = vadd.f32 %v2100, %v2196
      %v2198 = vpop.f32.mrb[0].mxu0
      %v2199 = vpop.f32.mrb[0].mxu0
      %v2200 = vadd.f32 %v2103, %v2199
      %v2201 = vpop.f32.mrb[0].mxu0
      %2202 = vmatprep.mubr.bf16.mxu0 %v1764
      %2203 = vmatmul.mubr.bf16.gmra.mrb[0].mxu0 %v1763
      %v2204 = vpop.f32.mrb[0].mxu0
      %v2205 = vadd.f32 %v2108, %v2204
      %v2206 = vpop.f32.mrb[0].mxu0
      %v2207 = vpop.f32.mrb[0].mxu0
      %v2208 = vadd.f32 %v2111, %v2207
      %v2209 = vpop.f32.mrb[0].mxu0
      %2210 = vmatprep.mubr.bf16.mxu0 %v1768
      %2211 = vmatmul.mubr.bf16.gmra.mrb[0].mxu0 %v1767
      %v2212 = vpop.f32.mrb[0].mxu0
      %v2213 = vadd.f32 %v2116, %v2212
      %v2214 = vpop.f32.mrb[0].mxu0
      %v2215 = vpop.f32.mrb[0].mxu0
      %v2216 = vadd.f32 %v2119, %v2215
      %v2217 = vpop.f32.mrb[0].mxu0
      %2218 = vdwg.mxu0
      %v2219 = vpack.c.bf16 %v2160, %v2157
      %v2220 = vpack.c.bf16 %v2168, %v2165
      %v2221 = vpack.c.bf16 %v2176, %v2173
      %v2222 = vpack.c.bf16 %v2184, %v2181
      %v2223 = vpack.c.bf16 %v2192, %v2189
      %v2224 = vpack.c.bf16 %v2200, %v2197
      %v2225 = vpack.c.bf16 %v2208, %v2205
      %v2226 = vpack.c.bf16 %v2216, %v2213
      %v2235 = vunpack.c.l.b16 %v2219
      %v2236 = vunpack.c.h.b16 %v2219
      %v2237 = vunpack.c.l.b16 %v2220
      %v2238 = vunpack.c.h.b16 %v2220
      %v2239 = vunpack.c.l.b16 %v2221
      %v2240 = vunpack.c.h.b16 %v2221
      %v2241 = vunpack.c.l.b16 %v2222
      %v2242 = vunpack.c.h.b16 %v2222
      %v2243 = vunpack.c.l.b16 %v2223
      %v2244 = vunpack.c.h.b16 %v2223
      %v2245 = vunpack.c.l.b16 %v2224
      %v2246 = vunpack.c.h.b16 %v2224
      %v2247 = vunpack.c.l.b16 %v2225
      %v2248 = vunpack.c.h.b16 %v2225
      %v2249 = vunpack.c.l.b16 %v2226
      %v2250 = vunpack.c.h.b16 %v2226
      %v2251 = vpack.c.b16 %v2235, %v2235
      %v2252 = vpack.c.b16 %v2236, %v2236
      %v2253 = vpack.c.b16 %v2237, %v2237
      %v2254 = vpack.c.b16 %v2238, %v2238
      %v2255 = vpack.c.b16 %v2239, %v2239
      %v2256 = vpack.c.b16 %v2240, %v2240
      %v2257 = vpack.c.b16 %v2241, %v2241
      %v2258 = vpack.c.b16 %v2242, %v2242
      %v2259 = vpack.c.b16 %v2243, %v2243
      %v2260 = vpack.c.b16 %v2244, %v2244
      %v2261 = vpack.c.b16 %v2245, %v2245
      %v2262 = vpack.c.b16 %v2246, %v2246
      %v2263 = vpack.c.b16 %v2247, %v2247
      %v2264 = vpack.c.b16 %v2248, %v2248
      %v2265 = vpack.c.b16 %v2249, %v2249
      %v2266 = vpack.c.b16 %v2250, %v2250
      %2283 = vst [vmem:[#allocation12] sm:$0xf] %v2251
      %2284 = vst [vmem:[#allocation12 + $0x4] sm:$0xf] %v2252
      %2285 = vst [vmem:[#allocation12 + $0x8] sm:$0xf] %v2253
      %2286 = vst [vmem:[#allocation12 + $0xc] sm:$0xf] %v2254
      %2287 = vst [vmem:[#allocation12 + $0x10] sm:$0xf] %v2255
      %2288 = vst [vmem:[#allocation12 + $0x14] sm:$0xf] %v2256
      %2289 = vst [vmem:[#allocation12 + $0x18] sm:$0xf] %v2257
      %2290 = vst [vmem:[#allocation12 + $0x1c] sm:$0xf] %v2258
      %2291 = vst [vmem:[#allocation12 + $0x20] sm:$0xf] %v2259
      %2292 = vst [vmem:[#allocation12 + $0x24] sm:$0xf] %v2260
      %2293 = vst [vmem:[#allocation12 + $0x28] sm:$0xf] %v2261
      %2294 = vst [vmem:[#allocation12 + $0x2c] sm:$0xf] %v2262
      %2295 = vst [vmem:[#allocation12 + $0x30] sm:$0xf] %v2263
      %2296 = vst [vmem:[#allocation12 + $0x34] sm:$0xf] %v2264
      %2297 = vst [vmem:[#allocation12 + $0x38] sm:$0xf] %v2265
      %2298 = vst [vmem:[#allocation12 + $0x3c] sm:$0xf] %v2266
    $region49: #{tpu_custom_call.1} parent=1 // pred_fallthru
      _
    // Predicated region
    $region50: #{tpu_custom_call.1} parent=1 // pred_check
      _
    $region51: #{tpu_custom_call.1} parent=1 // pred_check_branch
      %2300 = sbr.rel (0) target = $region53
    $region52: #{tpu_custom_call.1} parent=1 // pred_region
      %s2302 = ssub.s32 1024, 1024
      %2303 = vsyncadd [#allocation6], %s2302
      %s2304 = sshll.u32 [#allocation12], 4
      %s2305 = int_to_ptr.vmem [resolvable:$true] %s2304
      %2310 = dma.vmem_to_hbm [thread:$0]  %s2305, 1024, %s6, [#allocation6], 64, 64, 4
    $region53: #{tpu_custom_call.1} parent=1 // pred_fallthru
      _
    // Predicated region
    $region54: #{tpu_custom_call.1} parent=1 // pred_check
      _
    $region55: #{tpu_custom_call.1} parent=1 // pred_check_branch
      %2312 = sbr.rel (0) target = $region57
    $region56: #{tpu_custom_call.1} parent=1 // pred_region
      %2313 = dma.done [#allocation6], 1024
    $region57: #{tpu_custom_call.1} parent=1 // pred_fallthru
      _
    %2314 = vsyncpa [#allocation5], 1
    %2315 = vsyncpa [#allocation8], 1
    %2316 = vsyncpa [#allocation11], 1
    %2317 = vsyncpa [#allocation6], 1

</llo_original>
